<compile_context>
chip_gen: v7x
topology: tpu7x:2x2x1
jax: 0.10.0
libtpu: 0.0.40
codegen_flags: <defaults>
</compile_context>

<pallas_src>
import jax
import jax.numpy as jnp
from jax.experimental import pallas as pl
from jax.experimental.pallas import tpu as pltpu


# ----------------------------------------------------------------------------
# Pallas kernel: fused (split-weight concat) MLP + clamp, per N-tile.
# ----------------------------------------------------------------------------
def _position_warp_kernel(q_ref, ref_ref,
                          w0q_ref, w0r_ref, b0_ref,
                          w1_ref, b1_ref,
                          w2_ref, b2_ref,
                          out_ref):
    # ---- layer 0: Linear(input_dim, 128) on cat([query, aud, ref]) ----
    # cat realised as split-weight partial matmuls; the audio contribution is
    # pre-folded into b0_ref (mathematically identical).
    h = jnp.dot(q_ref[...], w0q_ref[...],
                preferred_element_type=jnp.float32)             # (TN, 128)
    h = h + jnp.dot(ref_ref[...], w0r_ref[...],
                    preferred_element_type=jnp.float32)         # (TN, 128)
    h = jnp.maximum(h + b0_ref[...], 0.0)                       # f32

    # ---- layer 1: Linear(128, 32) (zero-padded to 128 lanes) + ReLU ----
    h = jnp.dot(h.astype(jnp.bfloat16), w1_ref[...],
                preferred_element_type=jnp.float32) + b1_ref[...]
    h = jnp.maximum(h, 0.0)                                     # (TN, 128) f32

    # ---- layer 2: Linear(32, 2) (zero-padded to 8 lanes) + clamp[-10, 10] ----
    o = jnp.dot(h.astype(jnp.bfloat16), w2_ref[...],
                preferred_element_type=jnp.float32) + b2_ref[...]
    out_ref[...] = jnp.clip(o, -10.0, 10.0)                     # (TN, 8) f32


# ----------------------------------------------------------------------------
# Wrapper
# ----------------------------------------------------------------------------
def position_warp_forward(query_pts, aud, reference_feature, params, tile_n=None):
    f32, bf16 = jnp.float32, jnp.bfloat16
    n, d_q = query_pts.shape
    d_ref = reference_feature.shape[1]
    d_aud = 64

    # adaptive tile: big tiles for big N, small tiles so tiny N still gives
    # >= 2-4 grid steps (keeps both v7x TensorCores busy).
    if tile_n is None:
        tile_n = 2048 if n >= 8192 else (512 if n >= 2048 else 256)

    # --- split layer-0 weight, fold the audio path into the bias (f32, once) ---
    w0 = params["w0"].astype(f32)                        # (d_q + 64 + d_ref, 128)
    b0 = jnp.reshape(params["b0"], (1, -1)).astype(f32)  # (1, 128)
    w0q = w0[:d_q]                                       # (d_q, 128)
    w0a = w0[d_q:d_q + d_aud]                            # (64, 128)
    w0r = w0[d_q + d_aud:]                               # (d_ref, 128)
    aud_row = jnp.reshape(aud, (1, d_aud)).astype(f32)
    b0_eff = b0 + aud_row @ w0a                          # (1, 128) f32

    w1 = params["w1"].astype(f32)                        # (128, 32)
    b1 = jnp.reshape(params["b1"], (1, -1)).astype(f32)
    w2 = params["w2"].astype(f32)                        # (32, 2)
    b2 = jnp.reshape(params["b2"], (1, -1)).astype(f32)
    hid = w1.shape[1]                                    # 32
    out_dim = w2.shape[1]                                # 2
    lane = 128
    out_pad = 8                                          # small, sublane-friendly output width

    w1_p = jnp.zeros((w1.shape[0], lane), f32).at[:, :hid].set(w1)
    b1_p = jnp.zeros((1, lane), f32).at[:, :hid].set(b1)
    w2_p = jnp.zeros((lane, out_pad), f32).at[:hid, :out_dim].set(w2)
    b2_p = jnp.zeros((1, out_pad), f32).at[:, :out_dim].set(b2)

    # --- bf16 streaming operands (dots accumulate in f32 inside the kernel) ---
    q_b = query_pts.astype(bf16)
    ref_b = reference_feature.astype(bf16)
    w0q_b = w0q.astype(bf16)
    w0r_b = w0r.astype(bf16)
    w1_b = w1_p.astype(bf16)
    w2_b = w2_p.astype(bf16)

    # --- pad N to a multiple of tile_n (padded rows dropped afterwards) ---
    n_pad = pl.cdiv(n, tile_n) * tile_n
    if n_pad != n:
        q_b = jnp.pad(q_b, ((0, n_pad - n), (0, 0)))
        ref_b = jnp.pad(ref_b, ((0, n_pad - n), (0, 0)))

    def const_spec(arr):
        return pl.BlockSpec(arr.shape, lambda i: (0, 0))

    weights = [w0q_b, w0r_b, b0_eff, w1_b, b1_p, w2_b, b2_p]

    out_padded = pl.pallas_call(
        _position_warp_kernel,
        out_shape=jax.ShapeDtypeStruct((n_pad, out_pad), f32),
        grid=(n_pad // tile_n,),
        in_specs=[
            pl.BlockSpec((tile_n, d_q), lambda i: (i, 0)),
            pl.BlockSpec((tile_n, d_ref), lambda i: (i, 0)),
        ] + [const_spec(w) for w in weights],
        out_specs=pl.BlockSpec((tile_n, out_pad), lambda i: (i, 0)),
        compiler_params=pltpu.CompilerParams(
            dimension_semantics=("parallel",)),
    )(q_b, ref_b, *weights)

    # drop padded rows / padded output lanes (tiny 8-wide array)
    return out_padded[:n, :out_dim]


# ----------------------------------------------------------------------------
# Pure-JAX references
# ----------------------------------------------------------------------------
def reference_forward(query_pts, aud, reference_feature, params):
    """Full-f32 reference, mirrors the PyTorch forward exactly."""
    n = query_pts.shape[0]
    aud_b = jnp.broadcast_to(jnp.reshape(aud, (1, 64)), (n, 64))
    x = jnp.concatenate([query_pts, aud_b, reference_feature], axis=1)
    h = jax.nn.relu(x @ params["w0"] + params["b0"])
    h = jax.nn.relu(h @ params["w1"] + params["b1"])
    o = h @ params["w2"] + params["b2"]
    return jnp.clip(o, -10.0, 10.0)


def reference_forward_bf16_policy(query_pts, aud, reference_feature, params):
    """Reference using the kernel's exact precision policy (bf16 matmul
    operands, f32 accumulate / bias / ReLU / clamp, audio folded into b0)."""
    f32, bf16 = jnp.float32, jnp.bfloat16
    d_q = query_pts.shape[1]
    w0 = params["w0"].astype(f32)
    w0q, w0a, w0r = w0[:d_q], w0[d_q:d_q + 64], w0[d_q + 64:]
    b0_eff = (jnp.reshape(params["b0"], (1, -1)).astype(f32)
              + jnp.reshape(aud, (1, 64)).astype(f32) @ w0a)
    h = (jnp.dot(query_pts.astype(bf16), w0q.astype(bf16),
                 preferred_element_type=f32)
         + jnp.dot(reference_feature.astype(bf16), w0r.astype(bf16),
                   preferred_element_type=f32)
         + b0_eff)
    h = jnp.maximum(h, 0.0)
    h = jnp.dot(h.astype(bf16), params["w1"].astype(bf16),
                preferred_element_type=f32) + jnp.reshape(params["b1"], (1, -1))
    h = jnp.maximum(h, 0.0)
    o = jnp.dot(h.astype(bf16), params["w2"].astype(bf16),
                preferred_element_type=f32) + jnp.reshape(params["b2"], (1, -1))
    return jnp.clip(o, -10.0, 10.0)


def init_params(key, input_dim):
    # Non-degenerate init so the check is meaningful.  Output column 0 stays in
    # the linear range; column 1 is biased above +10 so clamp(-10, 10) is
    # genuinely exercised (original torch init normal(0, 0.001) would never
    # touch the clamp).
    k0, k1, k2, k3, k4 = jax.random.split(key, 5)
    return {
        "w0": jax.random.normal(k0, (input_dim, 128), jnp.float32) * 0.1,
        "b0": jax.random.normal(k1, (128,), jnp.float32) * 0.1,
        "w1": jax.random.normal(k2, (128, 32), jnp.float32) * 0.1,
        "b1": jax.random.normal(k3, (32,), jnp.float32) * 0.1,
        "w2": jax.random.normal(k4, (32, 2), jnp.float32) * 0.1,
        "b2": jnp.array([0.0, 11.0], jnp.float32),
    }


if __name__ == "__main__":
    N = 1000          # number of query points (deliberately not a tile multiple)
    D_Q = 3           # query_pts dim
    D_AUD = 64        # audio feature dim (broadcast per point)
    D_REF = 128       # reference feature dim
    INPUT_DIM = D_Q + D_AUD + D_REF

    key = jax.random.PRNGKey(0)
    k_q, k_a, k_r, k_p = jax.random.split(key, 4)
    query_pts = jax.random.normal(k_q, (N, D_Q), jnp.float32)
    aud = jax.random.normal(k_a, (D_AUD,), jnp.float32)
    reference_feature = jax.random.normal(k_r, (N, D_REF), jnp.float32)
    params = init_params(k_p, INPUT_DIM)

    out = position_warp_forward(query_pts, aud, reference_feature, params)
    out = jax.block_until_ready(out)
    assert out.shape == (N, 2)

    # 1) tight check vs. a reference that uses the kernel's exact precision
    #    policy (only accumulation-order differences remain).
    ref_policy = reference_forward_bf16_policy(query_pts, aud, reference_feature, params)
    err_policy = float(jnp.max(jnp.abs(out - ref_policy)))
    assert jnp.allclose(out, ref_policy, atol=2e-3, rtol=2e-3), err_policy

    # 2) sanity check vs. the full-f32 reference with a bf16-appropriate bound.
    ref_f32 = reference_forward(query_pts, aud, reference_feature, params)
    err_f32 = float(jnp.max(jnp.abs(out - ref_f32)))
    assert jnp.allclose(out, ref_f32, atol=3e-2, rtol=3e-2), err_f32

    print("KERNEL_OK")
</pallas_src>

<mosaic_0001>
module attributes {stable_mosaic.version = 11 : i64} {
  func.func @_position_warp_kernel(%arg0: i32, %arg1: memref<256x3xbf16, #tpu.memory_space<vmem>>, %arg2: memref<256x128xbf16, #tpu.memory_space<vmem>>, %arg3: memref<3x128xbf16, #tpu.memory_space<vmem>>, %arg4: memref<128x128xbf16, #tpu.memory_space<vmem>>, %arg5: memref<1x128xf32, #tpu.memory_space<vmem>>, %arg6: memref<128x128xbf16, #tpu.memory_space<vmem>>, %arg7: memref<1x128xf32, #tpu.memory_space<vmem>>, %arg8: memref<128x8xbf16, #tpu.memory_space<vmem>>, %arg9: memref<1x8xf32, #tpu.memory_space<vmem>>, %arg10: memref<256x8xf32, #tpu.memory_space<vmem>>) attributes {dimension_semantics = [#tpu.dimension_semantics<parallel>], iteration_bounds = array<i64: 4>, scalar_prefetch = 0 : i64, scratch_operands = 0 : i64, tpu.core_type = #tpu.core_type<tc>, window_params = [{transform_indices = @transform_0, window_bounds = array<i64: 256, 3>}, {transform_indices = @transform_1, window_bounds = array<i64: 256, 128>}, {pipeline_mode = #tpu.pipeline_mode<synchronous>, transform_indices = @transform_2, window_bounds = array<i64: 3, 128>}, {pipeline_mode = #tpu.pipeline_mode<synchronous>, transform_indices = @transform_3, window_bounds = array<i64: 128, 128>}, {pipeline_mode = #tpu.pipeline_mode<synchronous>, transform_indices = @transform_4, window_bounds = array<i64: 1, 128>}, {pipeline_mode = #tpu.pipeline_mode<synchronous>, transform_indices = @transform_5, window_bounds = array<i64: 128, 128>}, {pipeline_mode = #tpu.pipeline_mode<synchronous>, transform_indices = @transform_6, window_bounds = array<i64: 1, 128>}, {pipeline_mode = #tpu.pipeline_mode<synchronous>, transform_indices = @transform_7, window_bounds = array<i64: 128, 8>}, {pipeline_mode = #tpu.pipeline_mode<synchronous>, transform_indices = @transform_8, window_bounds = array<i64: 1, 8>}, {transform_indices = @transform_9, window_bounds = array<i64: 256, 8>}]} {
    %c0 = arith.constant 0 : index
    %c0_0 = arith.constant 0 : index
    %0 = vector.load %arg1[%c0, %c0_0] : memref<256x3xbf16, #tpu.memory_space<vmem>>, vector<256x3xbf16>
    %c0_1 = arith.constant 0 : index
    %c0_2 = arith.constant 0 : index
    %1 = vector.load %arg3[%c0_1, %c0_2] : memref<3x128xbf16, #tpu.memory_space<vmem>>, vector<3x128xbf16>
    %cst = arith.constant dense<0.000000e+00> : vector<256x128xf32>
    %2 = tpu.matmul %0, %1, %cst {dimension_numbers = #tpu.dot_dimension_numbers<[1], [0], [0], [1], [0, 0, 1, 1], [], []>} : vector<256x3xbf16>, vector<3x128xbf16>, vector<256x128xf32> -> vector<256x128xf32>
    %c0_3 = arith.constant 0 : index
    %c0_4 = arith.constant 0 : index
    %3 = vector.load %arg2[%c0_3, %c0_4] : memref<256x128xbf16, #tpu.memory_space<vmem>>, vector<256x128xbf16>
    %c0_5 = arith.constant 0 : index
    %c0_6 = arith.constant 0 : index
    %4 = vector.load %arg4[%c0_5, %c0_6] : memref<128x128xbf16, #tpu.memory_space<vmem>>, vector<128x128xbf16>
    %cst_7 = arith.constant dense<0.000000e+00> : vector<256x128xf32>
    %5 = tpu.matmul %3, %4, %cst_7 {dimension_numbers = #tpu.dot_dimension_numbers<[1], [0], [0], [1], [0, 0, 1, 1], [], []>} : vector<256x128xbf16>, vector<128x128xbf16>, vector<256x128xf32> -> vector<256x128xf32>
    %6 = arith.addf %2, %5 : vector<256x128xf32>
    %c0_8 = arith.constant 0 : index
    %c0_9 = arith.constant 0 : index
    %7 = vector.load %arg5[%c0_8, %c0_9] : memref<1x128xf32, #tpu.memory_space<vmem>>, vector<1x128xf32>
    %8 = vector.broadcast %7 : vector<1x128xf32> to vector<256x128xf32>
    %9 = arith.addf %6, %8 : vector<256x128xf32>
    %cst_10 = arith.constant 0.000000e+00 : f32
    %10 = vector.broadcast %cst_10 : f32 to vector<256x128xf32>
    %11 = arith.maximumf %9, %10 : vector<256x128xf32>
    %12 = arith.truncf %11 : vector<256x128xf32> to vector<256x128xbf16>
    %c0_11 = arith.constant 0 : index
    %c0_12 = arith.constant 0 : index
    %13 = vector.load %arg6[%c0_11, %c0_12] : memref<128x128xbf16, #tpu.memory_space<vmem>>, vector<128x128xbf16>
    %cst_13 = arith.constant dense<0.000000e+00> : vector<256x128xf32>
    %14 = tpu.matmul %12, %13, %cst_13 {dimension_numbers = #tpu.dot_dimension_numbers<[1], [0], [0], [1], [0, 0, 1, 1], [], []>} : vector<256x128xbf16>, vector<128x128xbf16>, vector<256x128xf32> -> vector<256x128xf32>
    %c0_14 = arith.constant 0 : index
    %c0_15 = arith.constant 0 : index
    %15 = vector.load %arg7[%c0_14, %c0_15] : memref<1x128xf32, #tpu.memory_space<vmem>>, vector<1x128xf32>
    %16 = vector.broadcast %15 : vector<1x128xf32> to vector<256x128xf32>
    %17 = arith.addf %14, %16 : vector<256x128xf32>
    %cst_16 = arith.constant 0.000000e+00 : f32
    %18 = vector.broadcast %cst_16 : f32 to vector<256x128xf32>
    %19 = arith.maximumf %17, %18 : vector<256x128xf32>
    %20 = arith.truncf %19 : vector<256x128xf32> to vector<256x128xbf16>
    %c0_17 = arith.constant 0 : index
    %c0_18 = arith.constant 0 : index
    %21 = vector.load %arg8[%c0_17, %c0_18] : memref<128x8xbf16, #tpu.memory_space<vmem>>, vector<128x8xbf16>
    %cst_19 = arith.constant dense<0.000000e+00> : vector<256x8xf32>
    %22 = tpu.matmul %20, %21, %cst_19 {dimension_numbers = #tpu.dot_dimension_numbers<[1], [0], [0], [1], [0, 0, 1, 1], [], []>} : vector<256x128xbf16>, vector<128x8xbf16>, vector<256x8xf32> -> vector<256x8xf32>
    %c0_20 = arith.constant 0 : index
    %c0_21 = arith.constant 0 : index
    %23 = vector.load %arg9[%c0_20, %c0_21] : memref<1x8xf32, #tpu.memory_space<vmem>>, vector<1x8xf32>
    %24 = vector.broadcast %23 : vector<1x8xf32> to vector<256x8xf32>
    %25 = arith.addf %22, %24 : vector<256x8xf32>
    %cst_22 = arith.constant -1.000000e+01 : f32
    %cst_23 = arith.constant 1.000000e+01 : f32
    %26 = vector.broadcast %cst_22 : f32 to vector<256x8xf32>
    %27 = arith.maximumf %26, %25 : vector<256x8xf32>
    %28 = vector.broadcast %cst_23 : f32 to vector<256x8xf32>
    %29 = arith.minimumf %28, %27 : vector<256x8xf32>
    %c0_24 = arith.constant 0 : index
    %c0_25 = arith.constant 0 : index
    %30 = vector.load %arg10[%c0_24, %c0_25] : memref<256x8xf32, #tpu.memory_space<vmem>>, vector<256x8xf32>
    tpu.vector_store %arg10[%c0_24, %c0_25], %29 {strides = array<i32>} : memref<256x8xf32, #tpu.memory_space<vmem>>, vector<256x8xf32>,
    return
  }
  func.func @transform_0(%arg0: i32) -> (i32, i32) {
    %c0_i32 = arith.constant 0 : i32
    %c0_i32_0 = arith.constant 0 : i32
    return %arg0, %c0_i32 : i32, i32
  }
  func.func @transform_1(%arg0: i32) -> (i32, i32) {
    %c0_i32 = arith.constant 0 : i32
    %c0_i32_0 = arith.constant 0 : i32
    return %arg0, %c0_i32 : i32, i32
  }
  func.func @transform_2(%arg0: i32) -> (i32, i32) {
    %c0_i32 = arith.constant 0 : i32
    %c0_i32_0 = arith.constant 0 : i32
    %c0_i32_1 = arith.constant 0 : i32
    return %c0_i32, %c0_i32_0 : i32, i32
  }
  func.func @transform_3(%arg0: i32) -> (i32, i32) {
    %c0_i32 = arith.constant 0 : i32
    %c0_i32_0 = arith.constant 0 : i32
    %c0_i32_1 = arith.constant 0 : i32
    return %c0_i32, %c0_i32_0 : i32, i32
  }
  func.func @transform_4(%arg0: i32) -> (i32, i32) {
    %c0_i32 = arith.constant 0 : i32
    %c0_i32_0 = arith.constant 0 : i32
    %c0_i32_1 = arith.constant 0 : i32
    return %c0_i32, %c0_i32_0 : i32, i32
  }
  func.func @transform_5(%arg0: i32) -> (i32, i32) {
    %c0_i32 = arith.constant 0 : i32
    %c0_i32_0 = arith.constant 0 : i32
    %c0_i32_1 = arith.constant 0 : i32
    return %c0_i32, %c0_i32_0 : i32, i32
  }
  func.func @transform_6(%arg0: i32) -> (i32, i32) {
    %c0_i32 = arith.constant 0 : i32
    %c0_i32_0 = arith.constant 0 : i32
    %c0_i32_1 = arith.constant 0 : i32
    return %c0_i32, %c0_i32_0 : i32, i32
  }
  func.func @transform_7(%arg0: i32) -> (i32, i32) {
    %c0_i32 = arith.constant 0 : i32
    %c0_i32_0 = arith.constant 0 : i32
    %c0_i32_1 = arith.constant 0 : i32
    return %c0_i32, %c0_i32_0 : i32, i32
  }
  func.func @transform_8(%arg0: i32) -> (i32, i32) {
    %c0_i32 = arith.constant 0 : i32
    %c0_i32_0 = arith.constant 0 : i32
    %c0_i32_1 = arith.constant 0 : i32
    return %c0_i32, %c0_i32_0 : i32, i32
  }
  func.func @transform_9(%arg0: i32) -> (i32, i32) {
    %c0_i32 = arith.constant 0 : i32
    %c0_i32_0 = arith.constant 0 : i32
    return %arg0, %c0_i32 : i32, i32
  }
}

</mosaic_0001>

<llo_original>
// kernel: tpu_custom_call.1
$region0: #{tpu_custom_call.1}
  #allocation0 [shape = 'u32[]', space=smem, size = 0x4, offset = 0x4, fixed_abs, tag = 'smem constant byte address 0x4 - core index']
  #allocation1 [shape = 'u32[144,128]{1,0:T(1,128)}', space=vmem, size = 0x12000, scoped, tag = 'internal scratch']
  %s0 = inlined_call_operand.vmem [shape: bf16[1024,3], index: 0, kind: input, shape index: {}]
  %s1 = inlined_call_operand.vmem [shape: bf16[1024,128], index: 1, kind: input, shape index: {}]
  %s2 = inlined_call_operand.vmem [shape: bf16[3,128], index: 2, kind: input, shape index: {}]
  %s3 = inlined_call_operand.vmem [shape: bf16[128,128], index: 3, kind: input, shape index: {}]
  %s4 = inlined_call_operand.vmem [shape: f32[1,128], index: 4, kind: input, shape index: {}]
  %s5 = inlined_call_operand.hbm [shape: bf16[128,128], index: 5, kind: input, shape index: {}]
  %s6 = inlined_call_operand.vmem [shape: f32[1,128], index: 6, kind: input, shape index: {}]
  %s7 = inlined_call_operand.vmem [shape: bf16[128,8], index: 7, kind: input, shape index: {}]
  %s8 = inlined_call_operand.vmem [shape: f32[1,8], index: 8, kind: input, shape index: {}]
  %s9 = inlined_call_operand.vmem [shape: f32[1024,8], index: 9, kind: output, shape index: {}]
  %s10 = sld [smem:[#allocation0]]
  $region73: #{tpu_custom_call.1} parent=0
    _
  %s12 = ssub.s32 1, %s10
  %s13 = scalar_select 0, %s12, %s10
  $region1: #{tpu_custom_call.1} parent=0
    #allocation2 [shape = 'u8[32768]{0}', space=vmem, size = 0x8000, scoped, tag = 'input window, operand 5, single buffered']
    #allocation3 [shape = 's32[2]{0}', space=sflag, size = 0x8, scoped, tag = 'scoped memory for tpu_custom_call.1']
    %14 = vsyncpa [#allocation3], 0
    loop: start=0, step=1, limit=6
    $region2: #{tpu_custom_call.1} parent=1 // loop_pre_header
      _
    $region3: #{tpu_custom_call.1} parent=1 // loop_header
      %s16 = sphi 0, %s20
      %p17 = scmp.ge.s32.totalorder %s16, 6
      %s26 = sphi 0, %s28
      %s29 = sphi 0, %s26
      %s30 = sphi 0, %s29
      %s46 = sphi 0, %s30
      %s52 = sphi 0, %s54
      %s55 = sphi 0, %s52
      %s56 = sphi 0, %s55
      %s72 = sphi 0, %s56
      %s76 = sphi 0, %s76
      %s78 = sphi 0, %s76
      %s79 = sphi 0, %s78
      %s93 = sphi 0, %s79
      %s97 = sphi 0, %s97
      %s99 = sphi 0, %s97
      %s100 = sphi 0, %s99
      %s114 = sphi 0, %s100
      %s118 = sphi 0, %s118
      %s120 = sphi 0, %s118
      %s121 = sphi 0, %s120
      %s135 = sphi 0, %s121
      %s139 = sphi 0, %s139
      %s141 = sphi 0, %s139
      %s142 = sphi 0, %s141
      %s156 = sphi 0, %s142
      %s160 = sphi 0, %s160
      %s162 = sphi 0, %s160
      %s163 = sphi 0, %s162
      %s177 = sphi 0, %s163
      %s181 = sphi 0, %s181
      %s183 = sphi 0, %s181
      %s184 = sphi 0, %s183
      %s198 = sphi 0, %s184
      %s202 = sphi 0, %s202
      %s204 = sphi 0, %s202
      %s205 = sphi 0, %s204
      %s219 = sphi 0, %s205
      %s225 = sphi 0, %s227
      %s228 = sphi 0, %s225
      %s229 = sphi 0, %s228
      %s245 = sphi 0, %s229
    $region4: #{tpu_custom_call.1} parent=1 // loop_header_branch
      %19 = sbr.rel (%p17) target = $region8
    $region5: #{tpu_custom_call.1} parent=1 // loop_body
      %s21 = ssub.s32 %s16, 1
      %s22 = ssub.s32 %s16, 2
      %s23 = sadd.s32 %s16, 1
      %s24 = ssub.s32 %s16, %s23
      %p25 = scmp.eq.s32.totalorder %s24, 0
      %s27 = sadd.s32 %s26, 1
      %s28 = scalar_select %p25, %s26, %s27
      %p31 = pneg %p25
      %p32 = scmp.eq.s32.totalorder %s16, 3
      %p33 = por %p31, %p32
      %p34 = scmp.ne.s32.totalorder %s26, %s29
      %p35 = scmp.eq.s32.totalorder %s16, 0
      %p36 = por %p34, %p35
      %p37 = scmp.ne.s32.totalorder %s26, %s29
      %p38 = scmp.eq.s32.totalorder %s21, 3
      %p39 = por %p37, %p38
      %p40 = scmp.ne.s32.totalorder %s29, %s30
      %p41 = scmp.eq.s32.totalorder %s21, 0
      %p42 = por %p40, %p41
      %p43 = scmp.ne.s32.totalorder %s29, %s30
      %p44 = scmp.eq.s32.totalorder %s22, 3
      %p45 = por %p43, %p44
      %p47 = scmp.ne.s32.totalorder %s30, %s46
      %p48 = scmp.eq.s32.totalorder %s22, 0
      %p49 = por %p47, %p48
      %s50 = ssub.s32 %s16, %s23
      %p51 = scmp.eq.s32.totalorder %s50, 0
      %s53 = sadd.s32 %s52, 1
      %s54 = scalar_select %p51, %s52, %s53
      %p57 = pneg %p51
      %p58 = scmp.eq.s32.totalorder %s16, 3
      %p59 = por %p57, %p58
      %p60 = scmp.ne.s32.totalorder %s52, %s55
      %p61 = scmp.eq.s32.totalorder %s16, 0
      %p62 = por %p60, %p61
      %p63 = scmp.ne.s32.totalorder %s52, %s55
      %p64 = scmp.eq.s32.totalorder %s21, 3
      %p65 = por %p63, %p64
      %p66 = scmp.ne.s32.totalorder %s55, %s56
      %p67 = scmp.eq.s32.totalorder %s21, 0
      %p68 = por %p66, %p67
      %p69 = scmp.ne.s32.totalorder %s55, %s56
      %p70 = scmp.eq.s32.totalorder %s22, 3
      %p71 = por %p69, %p70
      %p73 = scmp.ne.s32.totalorder %s56, %s72
      %p74 = scmp.eq.s32.totalorder %s22, 0
      %p75 = por %p73, %p74
      %s77 = sadd.s32 %s76, 1
      %p80 = scmp.eq.s32.totalorder %s16, 3
      %p81 = scmp.ne.s32.totalorder %s76, %s78
      %p82 = scmp.eq.s32.totalorder %s16, 0
      %p83 = por %p81, %p82
      %p84 = scmp.ne.s32.totalorder %s76, %s78
      %p85 = scmp.eq.s32.totalorder %s21, 3
      %p86 = por %p84, %p85
      %p87 = scmp.ne.s32.totalorder %s78, %s79
      %p88 = scmp.eq.s32.totalorder %s21, 0
      %p89 = por %p87, %p88
      %p90 = scmp.ne.s32.totalorder %s78, %s79
      %p91 = scmp.eq.s32.totalorder %s22, 3
      %p92 = por %p90, %p91
      %p94 = scmp.ne.s32.totalorder %s79, %s93
      %p95 = scmp.eq.s32.totalorder %s22, 0
      %p96 = por %p94, %p95
      %s98 = sadd.s32 %s97, 1
      %p101 = scmp.eq.s32.totalorder %s16, 3
      %p102 = scmp.ne.s32.totalorder %s97, %s99
      %p103 = scmp.eq.s32.totalorder %s16, 0
      %p104 = por %p102, %p103
      %p105 = scmp.ne.s32.totalorder %s97, %s99
      %p106 = scmp.eq.s32.totalorder %s21, 3
      %p107 = por %p105, %p106
      %p108 = scmp.ne.s32.totalorder %s99, %s100
      %p109 = scmp.eq.s32.totalorder %s21, 0
      %p110 = por %p108, %p109
      %p111 = scmp.ne.s32.totalorder %s99, %s100
      %p112 = scmp.eq.s32.totalorder %s22, 3
      %p113 = por %p111, %p112
      %p115 = scmp.ne.s32.totalorder %s100, %s114
      %p116 = scmp.eq.s32.totalorder %s22, 0
      %p117 = por %p115, %p116
      %s119 = sadd.s32 %s118, 1
      %p122 = scmp.eq.s32.totalorder %s16, 3
      %p123 = scmp.ne.s32.totalorder %s118, %s120
      %p124 = scmp.eq.s32.totalorder %s16, 0
      %p125 = por %p123, %p124
      %p126 = scmp.ne.s32.totalorder %s118, %s120
      %p127 = scmp.eq.s32.totalorder %s21, 3
      %p128 = por %p126, %p127
      %p129 = scmp.ne.s32.totalorder %s120, %s121
      %p130 = scmp.eq.s32.totalorder %s21, 0
      %p131 = por %p129, %p130
      %p132 = scmp.ne.s32.totalorder %s120, %s121
      %p133 = scmp.eq.s32.totalorder %s22, 3
      %p134 = por %p132, %p133
      %p136 = scmp.ne.s32.totalorder %s121, %s135
      %p137 = scmp.eq.s32.totalorder %s22, 0
      %p138 = por %p136, %p137
      %s140 = sadd.s32 %s139, 1
      %p143 = scmp.eq.s32.totalorder %s16, 3
      %p144 = scmp.ne.s32.totalorder %s139, %s141
      %p145 = scmp.eq.s32.totalorder %s16, 0
      %p146 = por %p144, %p145
      %p147 = scmp.ne.s32.totalorder %s139, %s141
      %p148 = scmp.eq.s32.totalorder %s21, 3
      %p149 = por %p147, %p148
      %p150 = scmp.ne.s32.totalorder %s141, %s142
      %p151 = scmp.eq.s32.totalorder %s21, 0
      %p152 = por %p150, %p151
      %p153 = scmp.ne.s32.totalorder %s141, %s142
      %p154 = scmp.eq.s32.totalorder %s22, 3
      %p155 = por %p153, %p154
      %p157 = scmp.ne.s32.totalorder %s142, %s156
      %p158 = scmp.eq.s32.totalorder %s22, 0
      %p159 = por %p157, %p158
      %s161 = sadd.s32 %s160, 1
      %p164 = scmp.eq.s32.totalorder %s16, 3
      %p165 = scmp.ne.s32.totalorder %s160, %s162
      %p166 = scmp.eq.s32.totalorder %s16, 0
      %p167 = por %p165, %p166
      %p168 = scmp.ne.s32.totalorder %s160, %s162
      %p169 = scmp.eq.s32.totalorder %s21, 3
      %p170 = por %p168, %p169
      %p171 = scmp.ne.s32.totalorder %s162, %s163
      %p172 = scmp.eq.s32.totalorder %s21, 0
      %p173 = por %p171, %p172
      %p174 = scmp.ne.s32.totalorder %s162, %s163
      %p175 = scmp.eq.s32.totalorder %s22, 3
      %p176 = por %p174, %p175
      %p178 = scmp.ne.s32.totalorder %s163, %s177
      %p179 = scmp.eq.s32.totalorder %s22, 0
      %p180 = por %p178, %p179
      %s182 = sadd.s32 %s181, 1
      %p185 = scmp.eq.s32.totalorder %s16, 3
      %p186 = scmp.ne.s32.totalorder %s181, %s183
      %p187 = scmp.eq.s32.totalorder %s16, 0
      %p188 = por %p186, %p187
      %p189 = scmp.ne.s32.totalorder %s181, %s183
      %p190 = scmp.eq.s32.totalorder %s21, 3
      %p191 = por %p189, %p190
      %p192 = scmp.ne.s32.totalorder %s183, %s184
      %p193 = scmp.eq.s32.totalorder %s21, 0
      %p194 = por %p192, %p193
      %p195 = scmp.ne.s32.totalorder %s183, %s184
      %p196 = scmp.eq.s32.totalorder %s22, 3
      %p197 = por %p195, %p196
      %p199 = scmp.ne.s32.totalorder %s184, %s198
      %p200 = scmp.eq.s32.totalorder %s22, 0
      %p201 = por %p199, %p200
      %s203 = sadd.s32 %s202, 1
      %p206 = scmp.eq.s32.totalorder %s16, 3
      %p207 = scmp.ne.s32.totalorder %s202, %s204
      %p208 = scmp.eq.s32.totalorder %s16, 0
      %p209 = por %p207, %p208
      %p210 = scmp.ne.s32.totalorder %s202, %s204
      %p211 = scmp.eq.s32.totalorder %s21, 3
      %p212 = por %p210, %p211
      %p213 = scmp.ne.s32.totalorder %s204, %s205
      %p214 = scmp.eq.s32.totalorder %s21, 0
      %p215 = por %p213, %p214
      %p216 = scmp.ne.s32.totalorder %s204, %s205
      %p217 = scmp.eq.s32.totalorder %s22, 3
      %p218 = por %p216, %p217
      %p220 = scmp.ne.s32.totalorder %s205, %s219
      %p221 = scmp.eq.s32.totalorder %s22, 0
      %p222 = por %p220, %p221
      %s223 = ssub.s32 %s16, %s23
      %p224 = scmp.eq.s32.totalorder %s223, 0
      %s226 = sadd.s32 %s225, 1
      %s227 = scalar_select %p224, %s225, %s226
      %p230 = pneg %p224
      %p231 = scmp.eq.s32.totalorder %s16, 3
      %p232 = por %p230, %p231
      %p233 = scmp.ne.s32.totalorder %s225, %s228
      %p234 = scmp.eq.s32.totalorder %s16, 0
      %p235 = por %p233, %p234
      %p236 = scmp.ne.s32.totalorder %s225, %s228
      %p237 = scmp.eq.s32.totalorder %s21, 3
      %p238 = por %p236, %p237
      %p239 = scmp.ne.s32.totalorder %s228, %s229
      %p240 = scmp.eq.s32.totalorder %s21, 0
      %p241 = por %p239, %p240
      %p242 = scmp.ne.s32.totalorder %s228, %s229
      %p243 = scmp.eq.s32.totalorder %s22, 3
      %p244 = por %p242, %p243
      %p246 = scmp.ne.s32.totalorder %s229, %s245
      %p247 = scmp.eq.s32.totalorder %s22, 0
      %p248 = por %p246, %p247
      %p249 = scmp.le.s32.totalorder 1, %s16
      %p250 = scmp.lt.s32.totalorder %s16, 5
      %p251 = pnand %p249, %p250
      %p252 = pneg %p251
      // Predicated region
      $region9: #{tpu_custom_call.1} parent=5 // pred_check
        _
      $region10: #{tpu_custom_call.1} parent=5 // pred_check_branch
        %254 = sbr.rel (%p251) target = $region12
      $region11: #{tpu_custom_call.1} parent=5 // pred_region
        %s255 = ssub.s32 %s16, 1
        // Predicated region
        $region13: #{tpu_custom_call.1} parent=11 // pred_check
          %p256 = pneg %p89
        $region14: #{tpu_custom_call.1} parent=11 // pred_check_branch
          %258 = sbr.rel (%p256) target = $region16
        $region15: #{tpu_custom_call.1} parent=11 // pred_region
          _
        $region16: #{tpu_custom_call.1} parent=11 // pred_fallthru
          _
        // Predicated region
        $region17: #{tpu_custom_call.1} parent=11 // pred_check
          %p259 = pneg %p110
        $region18: #{tpu_custom_call.1} parent=11 // pred_check_branch
          %261 = sbr.rel (%p259) target = $region20
        $region19: #{tpu_custom_call.1} parent=11 // pred_region
          _
        $region20: #{tpu_custom_call.1} parent=11 // pred_fallthru
          _
        // Predicated region
        $region21: #{tpu_custom_call.1} parent=11 // pred_check
          %p262 = pneg %p131
        $region22: #{tpu_custom_call.1} parent=11 // pred_check_branch
          %264 = sbr.rel (%p262) target = $region24
        $region23: #{tpu_custom_call.1} parent=11 // pred_region
          _
        $region24: #{tpu_custom_call.1} parent=11 // pred_fallthru
          _
        // Predicated region
        $region25: #{tpu_custom_call.1} parent=11 // pred_check
          %p265 = pneg %p152
        $region26: #{tpu_custom_call.1} parent=11 // pred_check_branch
          %267 = sbr.rel (%p265) target = $region28
        $region27: #{tpu_custom_call.1} parent=11 // pred_region
          %s269 = ssub.s32 1024, 1024
          %270 = vsyncadd [#allocation3], %s269
          %s271 = sshll.u32 [#allocation2], 4
          %s272 = int_to_ptr.vmem [resolvable:$true] %s271
          %277 = dma.hbm_to_vmem [thread:$0]  %s5, 1024, %s272, [#allocation3], 64, 64, 4
        $region28: #{tpu_custom_call.1} parent=11 // pred_fallthru
          _
        // Predicated region
        $region29: #{tpu_custom_call.1} parent=11 // pred_check
          %p278 = pneg %p173
        $region30: #{tpu_custom_call.1} parent=11 // pred_check_branch
          %280 = sbr.rel (%p278) target = $region32
        $region31: #{tpu_custom_call.1} parent=11 // pred_region
          _
        $region32: #{tpu_custom_call.1} parent=11 // pred_fallthru
          _
        // Predicated region
        $region33: #{tpu_custom_call.1} parent=11 // pred_check
          %p281 = pneg %p194
        $region34: #{tpu_custom_call.1} parent=11 // pred_check_branch
          %283 = sbr.rel (%p281) target = $region36
        $region35: #{tpu_custom_call.1} parent=11 // pred_region
          _
        $region36: #{tpu_custom_call.1} parent=11 // pred_fallthru
          _
        // Predicated region
        $region37: #{tpu_custom_call.1} parent=11 // pred_check
          %p284 = pneg %p215
        $region38: #{tpu_custom_call.1} parent=11 // pred_check_branch
          %286 = sbr.rel (%p284) target = $region40
        $region39: #{tpu_custom_call.1} parent=11 // pred_region
          _
        $region40: #{tpu_custom_call.1} parent=11 // pred_fallthru
          _
      $region12: #{tpu_custom_call.1} parent=5 // pred_fallthru
        _
      %p287 = scmp.lt.s32.totalorder %s16, 4
      // Predicated region
      $region41: #{tpu_custom_call.1} parent=5 // pred_check
        %p288 = pneg %p287
      $region42: #{tpu_custom_call.1} parent=5 // pred_check_branch
        %290 = sbr.rel (%p288) target = $region44
      $region43: #{tpu_custom_call.1} parent=5 // pred_region
        // Predicated region
        $region45: #{tpu_custom_call.1} parent=43 // pred_check
          %p291 = pneg %p36
        $region46: #{tpu_custom_call.1} parent=43 // pred_check_branch
          %293 = sbr.rel (%p291) target = $region48
        $region47: #{tpu_custom_call.1} parent=43 // pred_region
          %s294 = smul.u32 32, %s16
          %p295 = scmp.lt.s32.totalorder %s294, 127
          %s296 = scalar_select %p295, %s294, 127
          %s297 = smul.addr %s296, 4
          %s298 = scalar_lea.vmem %s0, %s297
          %s299 = smul.u32 32, %s16
        $region48: #{tpu_custom_call.1} parent=43 // pred_fallthru
          _
        // Predicated region
        $region49: #{tpu_custom_call.1} parent=43 // pred_check
          %p300 = pneg %p62
        $region50: #{tpu_custom_call.1} parent=43 // pred_check_branch
          %302 = sbr.rel (%p300) target = $region52
        $region51: #{tpu_custom_call.1} parent=43 // pred_region
          %s303 = smul.u32 32, %s16
          %p304 = scmp.lt.s32.totalorder %s303, 127
          %s305 = scalar_select %p304, %s303, 127
          %s306 = smul.addr %s305, 4
          %s307 = scalar_lea.vmem %s1, %s306
          %s308 = smul.u32 32, %s16
        $region52: #{tpu_custom_call.1} parent=43 // pred_fallthru
          _
      $region44: #{tpu_custom_call.1} parent=5 // pred_fallthru
        _
      %p309 = scmp.le.s32.totalorder 1, %s16
      %p310 = scmp.lt.s32.totalorder %s16, 5
      %p311 = pnand %p309, %p310
      %p312 = pneg %p311
      // Predicated region
      $region53: #{tpu_custom_call.1} parent=5 // pred_check
        _
      $region54: #{tpu_custom_call.1} parent=5 // pred_check_branch
        %314 = sbr.rel (%p311) target = $region56
      $region55: #{tpu_custom_call.1} parent=5 // pred_region
        %s315 = ssub.s32 %s16, 1
        // Predicated region
        $region57: #{tpu_custom_call.1} parent=55 // pred_check
          %p316 = pneg %p152
        $region58: #{tpu_custom_call.1} parent=55 // pred_check_branch
          %318 = sbr.rel (%p316) target = $region60
        $region59: #{tpu_custom_call.1} parent=55 // pred_region
          %319 = dma.done [#allocation3], 1024
        $region60: #{tpu_custom_call.1} parent=55 // pred_fallthru
          _
        %s320 = smul.u32 32, %s21
        %p321 = scmp.lt.s32.totalorder %s320, 127
        %s322 = scalar_select %p321, %s320, 127
        %s323 = smul.addr %s322, 4
        %s324 = scalar_lea.vmem %s0, %s323
        %p325 = pneg %p42
        %p326 = pneg %p39
        %s327 = smul.u32 32, %s21
        %p328 = scmp.lt.s32.totalorder %s327, 127
        %s329 = scalar_select %p328, %s327, 127
        %s330 = smul.addr %s329, 4
        %s331 = scalar_lea.vmem %s1, %s330
        %p332 = pneg %p68
        %p333 = pneg %p65
        %p334 = pneg %p89
        %p335 = pneg %p86
        %p336 = pneg %p110
        %p337 = pneg %p107
        %p338 = pneg %p131
        %p339 = pneg %p128
        %p340 = pneg %p152
        %p341 = pneg %p149
        %p342 = pneg %p173
        %p343 = pneg %p170
        %p344 = pneg %p194
        %p345 = pneg %p191
        %p346 = pneg %p215
        %p347 = pneg %p212
        %p348 = pneg %p241
        %p349 = pneg %p238
        %s350 = smul.u32 32, %s21
        %p351 = scmp.lt.s32.totalorder %s350, 127
        %s352 = scalar_select %p351, %s350, 127
        %s353 = smul.addr %s352, 8
        %s354 = scalar_lea.vmem %s9, %s353
        %s355 = smul.u32 32, %s21
        %p356 = scmp.lt.s32.totalorder %s355, 127
        %s357 = scalar_select %p356, %s355, 127
        %s358 = smul.addr %s357, 4
        %s359 = scalar_lea.vmem %s0, %s358
        %s360 = smul.u32 32, %s21
        %s361 = smul.u32 32, %s21
        %p362 = scmp.lt.s32.totalorder %s361, 127
        %s363 = scalar_select %p362, %s361, 127
        %s364 = smul.addr %s363, 4
        %s365 = scalar_lea.vmem %s1, %s364
        %s366 = smul.u32 32, %s21
        %s367 = smul.u32 32, %s21
        %p368 = scmp.lt.s32.totalorder %s367, 127
        %s369 = scalar_select %p368, %s367, 127
        %s370 = smul.addr %s369, 8
        %s371 = scalar_lea.vmem %s9, %s370
        %s372 = smul.u32 32, %s21
        %v374 = vld [vmem:[%s359] sm:$0xf]
        %v375 = vld [vmem:[%s359 + $0x4] sm:$0xf]
        %v376 = vld [vmem:[%s359 + $0x8] sm:$0xf]
        %v377 = vld [vmem:[%s359 + $0xc] sm:$0xf]
        %v378 = vld [vmem:[%s359 + $0x10] sm:$0xf]
        %v379 = vld [vmem:[%s359 + $0x14] sm:$0xf]
        %v380 = vld [vmem:[%s359 + $0x18] sm:$0xf]
        %v381 = vld [vmem:[%s359 + $0x1c] sm:$0xf]
        %v382 = vld [vmem:[%s359 + $0x20] sm:$0xf]
        %v383 = vld [vmem:[%s359 + $0x24] sm:$0xf]
        %v384 = vld [vmem:[%s359 + $0x28] sm:$0xf]
        %v385 = vld [vmem:[%s359 + $0x2c] sm:$0xf]
        %v386 = vld [vmem:[%s359 + $0x30] sm:$0xf]
        %v387 = vld [vmem:[%s359 + $0x34] sm:$0xf]
        %v388 = vld [vmem:[%s359 + $0x38] sm:$0xf]
        %v389 = vld [vmem:[%s359 + $0x3c] sm:$0xf]
        %v390 = vld [vmem:[%s359 + $0x40] sm:$0xf]
        %v391 = vld [vmem:[%s359 + $0x44] sm:$0xf]
        %v392 = vld [vmem:[%s359 + $0x48] sm:$0xf]
        %v393 = vld [vmem:[%s359 + $0x4c] sm:$0xf]
        %v394 = vld [vmem:[%s359 + $0x50] sm:$0xf]
        %v395 = vld [vmem:[%s359 + $0x54] sm:$0xf]
        %v396 = vld [vmem:[%s359 + $0x58] sm:$0xf]
        %v397 = vld [vmem:[%s359 + $0x5c] sm:$0xf]
        %v398 = vld [vmem:[%s359 + $0x60] sm:$0xf]
        %v399 = vld [vmem:[%s359 + $0x64] sm:$0xf]
        %v400 = vld [vmem:[%s359 + $0x68] sm:$0xf]
        %v401 = vld [vmem:[%s359 + $0x6c] sm:$0xf]
        %v402 = vld [vmem:[%s359 + $0x70] sm:$0xf]
        %v403 = vld [vmem:[%s359 + $0x74] sm:$0xf]
        %v404 = vld [vmem:[%s359 + $0x78] sm:$0xf]
        %v405 = vld [vmem:[%s359 + $0x7c] sm:$0xf]
        %v406 = vld [vmem:[%s2] sm:$0x3]
        %v407 = vld [vmem:[%s365] sm:$0xf]
        %v408 = vld [vmem:[%s365 + $0x4] sm:$0xf]
        %v409 = vld [vmem:[%s365 + $0x8] sm:$0xf]
        %v410 = vld [vmem:[%s365 + $0xc] sm:$0xf]
        %v411 = vld [vmem:[%s365 + $0x10] sm:$0xf]
        %v412 = vld [vmem:[%s365 + $0x14] sm:$0xf]
        %v413 = vld [vmem:[%s365 + $0x18] sm:$0xf]
        %v414 = vld [vmem:[%s365 + $0x1c] sm:$0xf]
        %v415 = vld [vmem:[%s365 + $0x20] sm:$0xf]
        %v416 = vld [vmem:[%s365 + $0x24] sm:$0xf]
        %v417 = vld [vmem:[%s365 + $0x28] sm:$0xf]
        %v418 = vld [vmem:[%s365 + $0x2c] sm:$0xf]
        %v419 = vld [vmem:[%s365 + $0x30] sm:$0xf]
        %v420 = vld [vmem:[%s365 + $0x34] sm:$0xf]
        %v421 = vld [vmem:[%s365 + $0x38] sm:$0xf]
        %v422 = vld [vmem:[%s365 + $0x3c] sm:$0xf]
        %v423 = vld [vmem:[%s365 + $0x40] sm:$0xf]
        %v424 = vld [vmem:[%s365 + $0x44] sm:$0xf]
        %v425 = vld [vmem:[%s365 + $0x48] sm:$0xf]
        %v426 = vld [vmem:[%s365 + $0x4c] sm:$0xf]
        %v427 = vld [vmem:[%s365 + $0x50] sm:$0xf]
        %v428 = vld [vmem:[%s365 + $0x54] sm:$0xf]
        %v429 = vld [vmem:[%s365 + $0x58] sm:$0xf]
        %v430 = vld [vmem:[%s365 + $0x5c] sm:$0xf]
        %v431 = vld [vmem:[%s365 + $0x60] sm:$0xf]
        %v432 = vld [vmem:[%s365 + $0x64] sm:$0xf]
        %v433 = vld [vmem:[%s365 + $0x68] sm:$0xf]
        %v434 = vld [vmem:[%s365 + $0x6c] sm:$0xf]
        %v435 = vld [vmem:[%s365 + $0x70] sm:$0xf]
        %v436 = vld [vmem:[%s365 + $0x74] sm:$0xf]
        %v437 = vld [vmem:[%s365 + $0x78] sm:$0xf]
        %v438 = vld [vmem:[%s365 + $0x7c] sm:$0xf]
        %v439 = vld [vmem:[%s3] sm:$0xf]
        %v440 = vld [vmem:[%s3 + $0x4] sm:$0xf]
        %v441 = vld [vmem:[%s3 + $0x8] sm:$0xf]
        %v442 = vld [vmem:[%s3 + $0xc] sm:$0xf]
        %v443 = vld [vmem:[%s3 + $0x10] sm:$0xf]
        %v444 = vld [vmem:[%s3 + $0x14] sm:$0xf]
        %v445 = vld [vmem:[%s3 + $0x18] sm:$0xf]
        %v446 = vld [vmem:[%s3 + $0x1c] sm:$0xf]
        %v447 = vld [vmem:[%s3 + $0x20] sm:$0xf]
        %v448 = vld [vmem:[%s3 + $0x24] sm:$0xf]
        %v449 = vld [vmem:[%s3 + $0x28] sm:$0xf]
        %v450 = vld [vmem:[%s3 + $0x2c] sm:$0xf]
        %v451 = vld [vmem:[%s3 + $0x30] sm:$0xf]
        %v452 = vld [vmem:[%s3 + $0x34] sm:$0xf]
        %v453 = vld [vmem:[%s3 + $0x38] sm:$0xf]
        %v454 = vld [vmem:[%s3 + $0x3c] sm:$0xf]
        %v487 = vunpack.c.l.b16 %v407
        %v488 = vunpack.c.l.b16 %v408
        %v489 = vunpack.c.l.b16 %v409
        %v490 = vunpack.c.l.b16 %v410
        %v491 = vunpack.c.l.b16 %v411
        %v492 = vunpack.c.l.b16 %v412
        %v493 = vunpack.c.l.b16 %v413
        %v494 = vunpack.c.l.b16 %v414
        %v495 = vunpack.c.l.b16 %v415
        %v496 = vunpack.c.l.b16 %v416
        %v497 = vunpack.c.l.b16 %v417
        %v498 = vunpack.c.l.b16 %v418
        %v499 = vunpack.c.l.b16 %v419
        %v500 = vunpack.c.l.b16 %v420
        %v501 = vunpack.c.l.b16 %v421
        %v502 = vunpack.c.l.b16 %v422
        %v503 = vunpack.c.l.b16 %v423
        %v504 = vunpack.c.l.b16 %v424
        %v505 = vunpack.c.l.b16 %v425
        %v506 = vunpack.c.l.b16 %v426
        %v507 = vunpack.c.l.b16 %v427
        %v508 = vunpack.c.l.b16 %v428
        %v509 = vunpack.c.l.b16 %v429
        %v510 = vunpack.c.l.b16 %v430
        %v511 = vunpack.c.l.b16 %v431
        %v512 = vunpack.c.l.b16 %v432
        %v513 = vunpack.c.l.b16 %v433
        %v514 = vunpack.c.l.b16 %v434
        %v515 = vunpack.c.l.b16 %v435
        %v516 = vunpack.c.l.b16 %v436
        %v517 = vunpack.c.l.b16 %v437
        %v518 = vunpack.c.l.b16 %v438
        %v519 = vpack.c.b16 %v488, %v487
        %v520 = vpack.c.b16 %v490, %v489
        %v521 = vpack.c.b16 %v492, %v491
        %v522 = vpack.c.b16 %v494, %v493
        %v523 = vpack.c.b16 %v496, %v495
        %v524 = vpack.c.b16 %v498, %v497
        %v525 = vpack.c.b16 %v500, %v499
        %v526 = vpack.c.b16 %v502, %v501
        %v527 = vpack.c.b16 %v504, %v503
        %v528 = vpack.c.b16 %v506, %v505
        %v529 = vpack.c.b16 %v508, %v507
        %v530 = vpack.c.b16 %v510, %v509
        %v531 = vpack.c.b16 %v512, %v511
        %v532 = vpack.c.b16 %v514, %v513
        %v533 = vpack.c.b16 %v516, %v515
        %v534 = vpack.c.b16 %v518, %v517
        %v567 = vunpack.c.l.b16 %v439
        %v568 = vunpack.c.l.b16 %v440
        %v569 = vunpack.c.l.b16 %v441
        %v570 = vunpack.c.l.b16 %v442
        %v571 = vunpack.c.l.b16 %v443
        %v572 = vunpack.c.l.b16 %v444
        %v573 = vunpack.c.l.b16 %v445
        %v574 = vunpack.c.l.b16 %v446
        %v575 = vunpack.c.l.b16 %v447
        %v576 = vunpack.c.l.b16 %v448
        %v577 = vunpack.c.l.b16 %v449
        %v578 = vunpack.c.l.b16 %v450
        %v579 = vunpack.c.l.b16 %v451
        %v580 = vunpack.c.l.b16 %v452
        %v581 = vunpack.c.l.b16 %v453
        %v582 = vunpack.c.l.b16 %v454
        %v583 = vpack.c.b16 %v568, %v567
        %v584 = vpack.c.b16 %v570, %v569
        %v585 = vpack.c.b16 %v572, %v571
        %v586 = vpack.c.b16 %v574, %v573
        %v587 = vpack.c.b16 %v576, %v575
        %v588 = vpack.c.b16 %v578, %v577
        %v589 = vpack.c.b16 %v580, %v579
        %v590 = vpack.c.b16 %v582, %v581
        %599 = vmatprep.subr.bf16.mxu0 0
        %600 = vmatpush1.bf16.msra.mxu0 %v583
        %601 = vmatprep.subr.bf16.mxu0 0
        %602 = vmatpush1.bf16.msra.mxu0 %v584
        %603 = vmatprep.subr.bf16.mxu0 0
        %604 = vmatpush1.bf16.msra.mxu0 %v585
        %605 = vmatprep.subr.bf16.mxu0 0
        %606 = vmatpush1.bf16.msra.mxu0 %v586
        %607 = vmatprep.subr.bf16.mxu0 0
        %608 = vmatpush1.bf16.msra.mxu0 %v587
        %609 = vmatprep.subr.bf16.mxu0 0
        %610 = vmatpush1.bf16.msra.mxu0 %v588
        %611 = vmatprep.subr.bf16.mxu0 0
        %612 = vmatpush1.bf16.msra.mxu0 %v589
        %613 = vmatprep.subr.bf16.mxu0 0
        %614 = vmatpush1.bf16.msra.mxu0 %v590
        %615 = vmatprep.subr.bf16.mxu0 0
        %616 = vmatpush1.bf16.msra.mxu0 0
        %617 = vmatprep.subr.bf16.mxu0 0
        %618 = vmatpush1.bf16.msra.mxu0 0
        %619 = vmatprep.subr.bf16.mxu0 0
        %620 = vmatpush1.bf16.msra.mxu0 0
        %621 = vmatprep.subr.bf16.mxu0 0
        %622 = vmatpush1.bf16.msra.mxu0 0
        %623 = vmatprep.subr.bf16.mxu0 0
        %624 = vmatpush1.bf16.msra.mxu0 0
        %625 = vmatprep.subr.bf16.mxu0 0
        %626 = vmatpush1.bf16.msra.mxu0 0
        %627 = vmatprep.subr.bf16.mxu0 0
        %628 = vmatpush1.bf16.msra.mxu0 0
        %629 = vmatprep.subr.bf16.mxu0 0
        %630 = vmatpush1.bf16.msra.mxu0 0
        %631 = vmatprep.mubr.bf16.mxu0 0
        %632 = vmatmul.mubr.bf16.gmra.mrb[0].mxu0 %v519
        %v633 = vpop.f32.mrb[0].mxu0
        %v634 = vadd.f32 0.0, %v633
        %v635 = vpop.f32.mrb[0].mxu0
        %v636 = vpop.f32.mrb[0].mxu0
        %v637 = vadd.f32 0.0, %v636
        %v638 = vpop.f32.mrb[0].mxu0
        %639 = vmatprep.mubr.bf16.mxu0 0
        %640 = vmatmul.mubr.bf16.gmra.mrb[0].mxu0 %v520
        %v641 = vpop.f32.mrb[0].mxu0
        %v642 = vadd.f32 0.0, %v641
        %v643 = vpop.f32.mrb[0].mxu0
        %v644 = vpop.f32.mrb[0].mxu0
        %v645 = vadd.f32 0.0, %v644
        %v646 = vpop.f32.mrb[0].mxu0
        %647 = vmatprep.mubr.bf16.mxu0 0
        %648 = vmatmul.mubr.bf16.gmra.mrb[0].mxu0 %v521
        %v649 = vpop.f32.mrb[0].mxu0
        %v650 = vadd.f32 0.0, %v649
        %v651 = vpop.f32.mrb[0].mxu0
        %v652 = vpop.f32.mrb[0].mxu0
        %v653 = vadd.f32 0.0, %v652
        %v654 = vpop.f32.mrb[0].mxu0
        %655 = vmatprep.mubr.bf16.mxu0 0
        %656 = vmatmul.mubr.bf16.gmra.mrb[0].mxu0 %v522
        %v657 = vpop.f32.mrb[0].mxu0
        %v658 = vadd.f32 0.0, %v657
        %v659 = vpop.f32.mrb[0].mxu0
        %v660 = vpop.f32.mrb[0].mxu0
        %v661 = vadd.f32 0.0, %v660
        %v662 = vpop.f32.mrb[0].mxu0
        %663 = vmatprep.mubr.bf16.mxu0 0
        %664 = vmatmul.mubr.bf16.gmra.mrb[0].mxu0 %v523
        %v665 = vpop.f32.mrb[0].mxu0
        %v666 = vadd.f32 0.0, %v665
        %v667 = vpop.f32.mrb[0].mxu0
        %v668 = vpop.f32.mrb[0].mxu0
        %v669 = vadd.f32 0.0, %v668
        %v670 = vpop.f32.mrb[0].mxu0
        %671 = vmatprep.mubr.bf16.mxu0 0
        %672 = vmatmul.mubr.bf16.gmra.mrb[0].mxu0 %v524
        %v673 = vpop.f32.mrb[0].mxu0
        %v674 = vadd.f32 0.0, %v673
        %v675 = vpop.f32.mrb[0].mxu0
        %v676 = vpop.f32.mrb[0].mxu0
        %v677 = vadd.f32 0.0, %v676
        %v678 = vpop.f32.mrb[0].mxu0
        %679 = vmatprep.mubr.bf16.mxu0 0
        %680 = vmatmul.mubr.bf16.gmra.mrb[0].mxu0 %v525
        %v681 = vpop.f32.mrb[0].mxu0
        %v682 = vadd.f32 0.0, %v681
        %v683 = vpop.f32.mrb[0].mxu0
        %v684 = vpop.f32.mrb[0].mxu0
        %v685 = vadd.f32 0.0, %v684
        %v686 = vpop.f32.mrb[0].mxu0
        %687 = vmatprep.mubr.bf16.mxu0 0
        %688 = vmatmul.mubr.bf16.gmra.mrb[0].mxu0 %v526
        %v689 = vpop.f32.mrb[0].mxu0
        %v690 = vadd.f32 0.0, %v689
        %v691 = vpop.f32.mrb[0].mxu0
        %v692 = vpop.f32.mrb[0].mxu0
        %v693 = vadd.f32 0.0, %v692
        %v694 = vpop.f32.mrb[0].mxu0
        %695 = vmatprep.mubr.bf16.mxu0 0
        %696 = vmatmul.mubr.bf16.gmra.mrb[0].mxu0 %v527
        %v697 = vpop.f32.mrb[0].mxu0
        %v698 = vadd.f32 0.0, %v697
        %v699 = vpop.f32.mrb[0].mxu0
        %v700 = vpop.f32.mrb[0].mxu0
        %v701 = vadd.f32 0.0, %v700
        %v702 = vpop.f32.mrb[0].mxu0
        %703 = vmatprep.mubr.bf16.mxu0 0
        %704 = vmatmul.mubr.bf16.gmra.mrb[0].mxu0 %v528
        %v705 = vpop.f32.mrb[0].mxu0
        %v706 = vadd.f32 0.0, %v705
        %v707 = vpop.f32.mrb[0].mxu0
        %v708 = vpop.f32.mrb[0].mxu0
        %v709 = vadd.f32 0.0, %v708
        %v710 = vpop.f32.mrb[0].mxu0
        %711 = vmatprep.mubr.bf16.mxu0 0
        %712 = vmatmul.mubr.bf16.gmra.mrb[0].mxu0 %v529
        %v713 = vpop.f32.mrb[0].mxu0
        %v714 = vadd.f32 0.0, %v713
        %v715 = vpop.f32.mrb[0].mxu0
        %v716 = vpop.f32.mrb[0].mxu0
        %v717 = vadd.f32 0.0, %v716
        %v718 = vpop.f32.mrb[0].mxu0
        %719 = vmatprep.mubr.bf16.mxu0 0
        %720 = vmatmul.mubr.bf16.gmra.mrb[0].mxu0 %v530
        %v721 = vpop.f32.mrb[0].mxu0
        %v722 = vadd.f32 0.0, %v721
        %v723 = vpop.f32.mrb[0].mxu0
        %v724 = vpop.f32.mrb[0].mxu0
        %v725 = vadd.f32 0.0, %v724
        %v726 = vpop.f32.mrb[0].mxu0
        %727 = vmatprep.mubr.bf16.mxu0 0
        %728 = vmatmul.mubr.bf16.gmra.mrb[0].mxu0 %v531
        %v729 = vpop.f32.mrb[0].mxu0
        %v730 = vadd.f32 0.0, %v729
        %v731 = vpop.f32.mrb[0].mxu0
        %v732 = vpop.f32.mrb[0].mxu0
        %v733 = vadd.f32 0.0, %v732
        %v734 = vpop.f32.mrb[0].mxu0
        %735 = vmatprep.mubr.bf16.mxu0 0
        %736 = vmatmul.mubr.bf16.gmra.mrb[0].mxu0 %v532
        %v737 = vpop.f32.mrb[0].mxu0
        %v738 = vadd.f32 0.0, %v737
        %v739 = vpop.f32.mrb[0].mxu0
        %v740 = vpop.f32.mrb[0].mxu0
        %v741 = vadd.f32 0.0, %v740
        %v742 = vpop.f32.mrb[0].mxu0
        %743 = vmatprep.mubr.bf16.mxu0 0
        %744 = vmatmul.mubr.bf16.gmra.mrb[0].mxu0 %v533
        %v745 = vpop.f32.mrb[0].mxu0
        %v746 = vadd.f32 0.0, %v745
        %v747 = vpop.f32.mrb[0].mxu0
        %v748 = vpop.f32.mrb[0].mxu0
        %v749 = vadd.f32 0.0, %v748
        %v750 = vpop.f32.mrb[0].mxu0
        %751 = vmatprep.mubr.bf16.mxu0 0
        %752 = vmatmul.mubr.bf16.gmra.mrb[0].mxu0 %v534
        %v753 = vpop.f32.mrb[0].mxu0
        %v754 = vadd.f32 0.0, %v753
        %v755 = vpop.f32.mrb[0].mxu0
        %v756 = vpop.f32.mrb[0].mxu0
        %v757 = vadd.f32 0.0, %v756
        %v758 = vpop.f32.mrb[0].mxu0
        %759 = vdwg.mxu0
        %v792 = vunpack.c.l.b16 %v374
        %v793 = vunpack.c.l.b16 %v375
        %v794 = vunpack.c.l.b16 %v376
        %v795 = vunpack.c.l.b16 %v377
        %v796 = vunpack.c.l.b16 %v378
        %v797 = vunpack.c.l.b16 %v379
        %v798 = vunpack.c.l.b16 %v380
        %v799 = vunpack.c.l.b16 %v381
        %v800 = vunpack.c.l.b16 %v382
        %v801 = vunpack.c.l.b16 %v383
        %v802 = vunpack.c.l.b16 %v384
        %v803 = vunpack.c.l.b16 %v385
        %v804 = vunpack.c.l.b16 %v386
        %v805 = vunpack.c.l.b16 %v387
        %v806 = vunpack.c.l.b16 %v388
        %v807 = vunpack.c.l.b16 %v389
        %v808 = vunpack.c.l.b16 %v390
        %v809 = vunpack.c.l.b16 %v391
        %v810 = vunpack.c.l.b16 %v392
        %v811 = vunpack.c.l.b16 %v393
        %v812 = vunpack.c.l.b16 %v394
        %v813 = vunpack.c.l.b16 %v395
        %v814 = vunpack.c.l.b16 %v396
        %v815 = vunpack.c.l.b16 %v397
        %v816 = vunpack.c.l.b16 %v398
        %v817 = vunpack.c.l.b16 %v399
        %v818 = vunpack.c.l.b16 %v400
        %v819 = vunpack.c.l.b16 %v401
        %v820 = vunpack.c.l.b16 %v402
        %v821 = vunpack.c.l.b16 %v403
        %v822 = vunpack.c.l.b16 %v404
        %v823 = vunpack.c.l.b16 %v405
        %v824 = vpack.c.b16 %v793, %v792
        %v825 = vpack.c.b16 %v795, %v794
        %v826 = vpack.c.b16 %v797, %v796
        %v827 = vpack.c.b16 %v799, %v798
        %v828 = vpack.c.b16 %v801, %v800
        %v829 = vpack.c.b16 %v803, %v802
        %v830 = vpack.c.b16 %v805, %v804
        %v831 = vpack.c.b16 %v807, %v806
        %v832 = vpack.c.b16 %v809, %v808
        %v833 = vpack.c.b16 %v811, %v810
        %v834 = vpack.c.b16 %v813, %v812
        %v835 = vpack.c.b16 %v815, %v814
        %v836 = vpack.c.b16 %v817, %v816
        %v837 = vpack.c.b16 %v819, %v818
        %v838 = vpack.c.b16 %v821, %v820
        %v839 = vpack.c.b16 %v823, %v822
        %vm840 = vcmask 23552
        %v842 = vsel %vm840, %v824, 0
        %v845 = vsel %vm840, %v825, 0
        %v848 = vsel %vm840, %v826, 0
        %v851 = vsel %vm840, %v827, 0
        %v854 = vsel %vm840, %v828, 0
        %v857 = vsel %vm840, %v829, 0
        %v860 = vsel %vm840, %v830, 0
        %v863 = vsel %vm840, %v831, 0
        %v866 = vsel %vm840, %v832, 0
        %v869 = vsel %vm840, %v833, 0
        %v872 = vsel %vm840, %v834, 0
        %v875 = vsel %vm840, %v835, 0
        %v878 = vsel %vm840, %v836, 0
        %v881 = vsel %vm840, %v837, 0
        %v884 = vsel %vm840, %v838, 0
        %v887 = vsel %vm840, %v839, 0
        %vm889 = vcmask 1040384
        %vm890 = vcmask 1041408
        %v891 = vsel %vm889, 4294967295, 65535
        %v892 = vsel %vm890, %v891, 0
        %v894 = vand.u32 %v406, %v892
        %896 = vmatprep.subr.bf16.mxu0 0
        %897 = vmatpush1.bf16.msra.mxu0 %v894
        %898 = vmatprep.subr.bf16.mxu0 0
        %899 = vmatpush1.bf16.msra.mxu0 0
        %900 = vmatprep.subr.bf16.mxu0 0
        %901 = vmatpush1.bf16.msra.mxu0 0
        %902 = vmatprep.subr.bf16.mxu0 0
        %903 = vmatpush1.bf16.msra.mxu0 0
        %904 = vmatprep.subr.bf16.mxu0 0
        %905 = vmatpush1.bf16.msra.mxu0 0
        %906 = vmatprep.subr.bf16.mxu0 0
        %907 = vmatpush1.bf16.msra.mxu0 0
        %908 = vmatprep.subr.bf16.mxu0 0
        %909 = vmatpush1.bf16.msra.mxu0 0
        %910 = vmatprep.subr.bf16.mxu0 0
        %911 = vmatpush1.bf16.msra.mxu0 0
        %912 = vmatprep.subr.bf16.mxu0 0
        %913 = vmatpush1.bf16.msra.mxu0 0
        %914 = vmatprep.subr.bf16.mxu0 0
        %915 = vmatpush1.bf16.msra.mxu0 0
        %916 = vmatprep.subr.bf16.mxu0 0
        %917 = vmatpush1.bf16.msra.mxu0 0
        %918 = vmatprep.subr.bf16.mxu0 0
        %919 = vmatpush1.bf16.msra.mxu0 0
        %920 = vmatprep.subr.bf16.mxu0 0
        %921 = vmatpush1.bf16.msra.mxu0 0
        %922 = vmatprep.subr.bf16.mxu0 0
        %923 = vmatpush1.bf16.msra.mxu0 0
        %924 = vmatprep.subr.bf16.mxu0 0
        %925 = vmatpush1.bf16.msra.mxu0 0
        %926 = vmatprep.subr.bf16.mxu0 0
        %927 = vmatpush1.bf16.msra.mxu0 0
        %928 = vmatprep.mubr.bf16.mxu0 0
        %929 = vmatmul.mubr.bf16.gmra.mrb[0].mxu0 %v842
        %v930 = vpop.f32.mrb[0].mxu0
        %v931 = vadd.f32 %v634, %v930
        %v932 = vpop.f32.mrb[0].mxu0
        %v933 = vpop.f32.mrb[0].mxu0
        %v934 = vadd.f32 %v637, %v933
        %v935 = vpop.f32.mrb[0].mxu0
        %936 = vmatprep.mubr.bf16.mxu0 0
        %937 = vmatmul.mubr.bf16.gmra.mrb[0].mxu0 %v845
        %v938 = vpop.f32.mrb[0].mxu0
        %v939 = vadd.f32 %v642, %v938
        %v940 = vpop.f32.mrb[0].mxu0
        %v941 = vpop.f32.mrb[0].mxu0
        %v942 = vadd.f32 %v645, %v941
        %v943 = vpop.f32.mrb[0].mxu0
        %944 = vmatprep.mubr.bf16.mxu0 0
        %945 = vmatmul.mubr.bf16.gmra.mrb[0].mxu0 %v848
        %v946 = vpop.f32.mrb[0].mxu0
        %v947 = vadd.f32 %v650, %v946
        %v948 = vpop.f32.mrb[0].mxu0
        %v949 = vpop.f32.mrb[0].mxu0
        %v950 = vadd.f32 %v653, %v949
        %v951 = vpop.f32.mrb[0].mxu0
        %952 = vmatprep.mubr.bf16.mxu0 0
        %953 = vmatmul.mubr.bf16.gmra.mrb[0].mxu0 %v851
        %v954 = vpop.f32.mrb[0].mxu0
        %v955 = vadd.f32 %v658, %v954
        %v956 = vpop.f32.mrb[0].mxu0
        %v957 = vpop.f32.mrb[0].mxu0
        %v958 = vadd.f32 %v661, %v957
        %v959 = vpop.f32.mrb[0].mxu0
        %960 = vmatprep.mubr.bf16.mxu0 0
        %961 = vmatmul.mubr.bf16.gmra.mrb[0].mxu0 %v854
        %v962 = vpop.f32.mrb[0].mxu0
        %v963 = vadd.f32 %v666, %v962
        %v964 = vpop.f32.mrb[0].mxu0
        %v965 = vpop.f32.mrb[0].mxu0
        %v966 = vadd.f32 %v669, %v965
        %v967 = vpop.f32.mrb[0].mxu0
        %968 = vmatprep.mubr.bf16.mxu0 0
        %969 = vmatmul.mubr.bf16.gmra.mrb[0].mxu0 %v857
        %v970 = vpop.f32.mrb[0].mxu0
        %v971 = vadd.f32 %v674, %v970
        %v972 = vpop.f32.mrb[0].mxu0
        %v973 = vpop.f32.mrb[0].mxu0
        %v974 = vadd.f32 %v677, %v973
        %v975 = vpop.f32.mrb[0].mxu0
        %976 = vmatprep.mubr.bf16.mxu0 0
        %977 = vmatmul.mubr.bf16.gmra.mrb[0].mxu0 %v860
        %v978 = vpop.f32.mrb[0].mxu0
        %v979 = vadd.f32 %v682, %v978
        %v980 = vpop.f32.mrb[0].mxu0
        %v981 = vpop.f32.mrb[0].mxu0
        %v982 = vadd.f32 %v685, %v981
        %v983 = vpop.f32.mrb[0].mxu0
        %984 = vmatprep.mubr.bf16.mxu0 0
        %985 = vmatmul.mubr.bf16.gmra.mrb[0].mxu0 %v863
        %v986 = vpop.f32.mrb[0].mxu0
        %v987 = vadd.f32 %v690, %v986
        %v988 = vpop.f32.mrb[0].mxu0
        %v989 = vpop.f32.mrb[0].mxu0
        %v990 = vadd.f32 %v693, %v989
        %v991 = vpop.f32.mrb[0].mxu0
        %992 = vmatprep.mubr.bf16.mxu0 0
        %993 = vmatmul.mubr.bf16.gmra.mrb[0].mxu0 %v866
        %v994 = vpop.f32.mrb[0].mxu0
        %v995 = vadd.f32 %v698, %v994
        %v996 = vpop.f32.mrb[0].mxu0
        %v997 = vpop.f32.mrb[0].mxu0
        %v998 = vadd.f32 %v701, %v997
        %v999 = vpop.f32.mrb[0].mxu0
        %1000 = vmatprep.mubr.bf16.mxu0 0
        %1001 = vmatmul.mubr.bf16.gmra.mrb[0].mxu0 %v869
        %v1002 = vpop.f32.mrb[0].mxu0
        %v1003 = vadd.f32 %v706, %v1002
        %v1004 = vpop.f32.mrb[0].mxu0
        %v1005 = vpop.f32.mrb[0].mxu0
        %v1006 = vadd.f32 %v709, %v1005
        %v1007 = vpop.f32.mrb[0].mxu0
        %1008 = vmatprep.mubr.bf16.mxu0 0
        %1009 = vmatmul.mubr.bf16.gmra.mrb[0].mxu0 %v872
        %v1010 = vpop.f32.mrb[0].mxu0
        %v1011 = vadd.f32 %v714, %v1010
        %v1012 = vpop.f32.mrb[0].mxu0
        %v1013 = vpop.f32.mrb[0].mxu0
        %v1014 = vadd.f32 %v717, %v1013
        %v1015 = vpop.f32.mrb[0].mxu0
        %1016 = vmatprep.mubr.bf16.mxu0 0
        %1017 = vmatmul.mubr.bf16.gmra.mrb[0].mxu0 %v875
        %v1018 = vpop.f32.mrb[0].mxu0
        %v1019 = vadd.f32 %v722, %v1018
        %v1020 = vpop.f32.mrb[0].mxu0
        %v1021 = vpop.f32.mrb[0].mxu0
        %v1022 = vadd.f32 %v725, %v1021
        %v1023 = vpop.f32.mrb[0].mxu0
        %1024 = vmatprep.mubr.bf16.mxu0 0
        %1025 = vmatmul.mubr.bf16.gmra.mrb[0].mxu0 %v878
        %v1026 = vpop.f32.mrb[0].mxu0
        %v1027 = vadd.f32 %v730, %v1026
        %v1028 = vpop.f32.mrb[0].mxu0
        %v1029 = vpop.f32.mrb[0].mxu0
        %v1030 = vadd.f32 %v733, %v1029
        %v1031 = vpop.f32.mrb[0].mxu0
        %1032 = vmatprep.mubr.bf16.mxu0 0
        %1033 = vmatmul.mubr.bf16.gmra.mrb[0].mxu0 %v881
        %v1034 = vpop.f32.mrb[0].mxu0
        %v1035 = vadd.f32 %v738, %v1034
        %v1036 = vpop.f32.mrb[0].mxu0
        %v1037 = vpop.f32.mrb[0].mxu0
        %v1038 = vadd.f32 %v741, %v1037
        %v1039 = vpop.f32.mrb[0].mxu0
        %1040 = vmatprep.mubr.bf16.mxu0 0
        %1041 = vmatmul.mubr.bf16.gmra.mrb[0].mxu0 %v884
        %v1042 = vpop.f32.mrb[0].mxu0
        %v1043 = vadd.f32 %v746, %v1042
        %v1044 = vpop.f32.mrb[0].mxu0
        %v1045 = vpop.f32.mrb[0].mxu0
        %v1046 = vadd.f32 %v749, %v1045
        %v1047 = vpop.f32.mrb[0].mxu0
        %1048 = vmatprep.mubr.bf16.mxu0 0
        %1049 = vmatmul.mubr.bf16.gmra.mrb[0].mxu0 %v887
        %v1050 = vpop.f32.mrb[0].mxu0
        %v1051 = vadd.f32 %v754, %v1050
        %v1052 = vpop.f32.mrb[0].mxu0
        %v1053 = vpop.f32.mrb[0].mxu0
        %v1054 = vadd.f32 %v757, %v1053
        %v1055 = vpop.f32.mrb[0].mxu0
        %1056 = vdwg.mxu0
        %v1057 = vld [vmem:[%s4] sm:$0x1]
        %v1059 = vlaneseq
        %v1060 = vshrl.u32 %v1059, 7
        %v1061 = vsub.s32 0, %v1060
        %v1062 = vrot.slane %v1057, %v1061
        %v1064 = vadd.f32 %v931, %v1062
        %v1065 = vadd.f32 %v934, %v1062
        %v1066 = vadd.f32 %v939, %v1062
        %v1067 = vadd.f32 %v942, %v1062
        %v1068 = vadd.f32 %v947, %v1062
        %v1069 = vadd.f32 %v950, %v1062
        %v1070 = vadd.f32 %v955, %v1062
        %v1071 = vadd.f32 %v958, %v1062
        %v1072 = vadd.f32 %v963, %v1062
        %v1073 = vadd.f32 %v966, %v1062
        %v1074 = vadd.f32 %v971, %v1062
        %v1075 = vadd.f32 %v974, %v1062
        %v1076 = vadd.f32 %v979, %v1062
        %v1077 = vadd.f32 %v982, %v1062
        %v1078 = vadd.f32 %v987, %v1062
        %v1079 = vadd.f32 %v990, %v1062
        %v1080 = vadd.f32 %v995, %v1062
        %v1081 = vadd.f32 %v998, %v1062
        %v1082 = vadd.f32 %v1003, %v1062
        %v1083 = vadd.f32 %v1006, %v1062
        %v1084 = vadd.f32 %v1011, %v1062
        %v1085 = vadd.f32 %v1014, %v1062
        %v1086 = vadd.f32 %v1019, %v1062
        %v1087 = vadd.f32 %v1022, %v1062
        %v1088 = vadd.f32 %v1027, %v1062
        %v1089 = vadd.f32 %v1030, %v1062
        %v1090 = vadd.f32 %v1035, %v1062
        %v1091 = vadd.f32 %v1038, %v1062
        %v1092 = vadd.f32 %v1043, %v1062
        %v1093 = vadd.f32 %v1046, %v1062
        %v1094 = vadd.f32 %v1051, %v1062
        %v1095 = vadd.f32 %v1054, %v1062
        %v1096 = vmax.f32 %v1064, 0.0
        %v1097 = vmax.f32 %v1065, 0.0
        %v1098 = vmax.f32 %v1066, 0.0
        %v1099 = vmax.f32 %v1067, 0.0
        %v1100 = vmax.f32 %v1068, 0.0
        %v1101 = vmax.f32 %v1069, 0.0
        %v1102 = vmax.f32 %v1070, 0.0
        %v1103 = vmax.f32 %v1071, 0.0
        %v1104 = vmax.f32 %v1072, 0.0
        %v1105 = vmax.f32 %v1073, 0.0
        %v1106 = vmax.f32 %v1074, 0.0
        %v1107 = vmax.f32 %v1075, 0.0
        %v1108 = vmax.f32 %v1076, 0.0
        %v1109 = vmax.f32 %v1077, 0.0
        %v1110 = vmax.f32 %v1078, 0.0
        %v1111 = vmax.f32 %v1079, 0.0
        %v1112 = vmax.f32 %v1080, 0.0
        %v1113 = vmax.f32 %v1081, 0.0
        %v1114 = vmax.f32 %v1082, 0.0
        %v1115 = vmax.f32 %v1083, 0.0
        %v1116 = vmax.f32 %v1084, 0.0
        %v1117 = vmax.f32 %v1085, 0.0
        %v1118 = vmax.f32 %v1086, 0.0
        %v1119 = vmax.f32 %v1087, 0.0
        %v1120 = vmax.f32 %v1088, 0.0
        %v1121 = vmax.f32 %v1089, 0.0
        %v1122 = vmax.f32 %v1090, 0.0
        %v1123 = vmax.f32 %v1091, 0.0
        %v1124 = vmax.f32 %v1092, 0.0
        %v1125 = vmax.f32 %v1093, 0.0
        %v1126 = vmax.f32 %v1094, 0.0
        %v1127 = vmax.f32 %v1095, 0.0
        %v1128 = vpack.c.bf16 %v1097, %v1096
        %v1129 = vpack.c.bf16 %v1099, %v1098
        %v1130 = vpack.c.bf16 %v1101, %v1100
        %v1131 = vpack.c.bf16 %v1103, %v1102
        %v1132 = vpack.c.bf16 %v1105, %v1104
        %v1133 = vpack.c.bf16 %v1107, %v1106
        %v1134 = vpack.c.bf16 %v1109, %v1108
        %v1135 = vpack.c.bf16 %v1111, %v1110
        %v1136 = vpack.c.bf16 %v1113, %v1112
        %v1137 = vpack.c.bf16 %v1115, %v1114
        %v1138 = vpack.c.bf16 %v1117, %v1116
        %v1139 = vpack.c.bf16 %v1119, %v1118
        %v1140 = vpack.c.bf16 %v1121, %v1120
        %v1141 = vpack.c.bf16 %v1123, %v1122
        %v1142 = vpack.c.bf16 %v1125, %v1124
        %v1143 = vpack.c.bf16 %v1127, %v1126
        %v1144 = vld [vmem:[#allocation2] sm:$0xf]
        %v1145 = vld [vmem:[#allocation2 + $0x4] sm:$0xf]
        %v1146 = vld [vmem:[#allocation2 + $0x8] sm:$0xf]
        %v1147 = vld [vmem:[#allocation2 + $0xc] sm:$0xf]
        %v1148 = vld [vmem:[#allocation2 + $0x10] sm:$0xf]
        %v1149 = vld [vmem:[#allocation2 + $0x14] sm:$0xf]
        %v1150 = vld [vmem:[#allocation2 + $0x18] sm:$0xf]
        %v1151 = vld [vmem:[#allocation2 + $0x1c] sm:$0xf]
        %v1152 = vld [vmem:[#allocation2 + $0x20] sm:$0xf]
        %v1153 = vld [vmem:[#allocation2 + $0x24] sm:$0xf]
        %v1154 = vld [vmem:[#allocation2 + $0x28] sm:$0xf]
        %v1155 = vld [vmem:[#allocation2 + $0x2c] sm:$0xf]
        %v1156 = vld [vmem:[#allocation2 + $0x30] sm:$0xf]
        %v1157 = vld [vmem:[#allocation2 + $0x34] sm:$0xf]
        %v1158 = vld [vmem:[#allocation2 + $0x38] sm:$0xf]
        %v1159 = vld [vmem:[#allocation2 + $0x3c] sm:$0xf]
        %v1160 = vld [vmem:[%s6] sm:$0x1]
        %v1162 = vlaneseq
        %v1163 = vshrl.u32 %v1162, 7
        %v1164 = vsub.s32 0, %v1163
        %v1165 = vrot.slane %v1160, %v1164
        %v1183 = vunpack.c.l.b16 %v1144
        %v1184 = vunpack.c.l.b16 %v1145
        %v1185 = vunpack.c.l.b16 %v1146
        %v1186 = vunpack.c.l.b16 %v1147
        %v1187 = vunpack.c.l.b16 %v1148
        %v1188 = vunpack.c.l.b16 %v1149
        %v1189 = vunpack.c.l.b16 %v1150
        %v1190 = vunpack.c.l.b16 %v1151
        %v1191 = vunpack.c.l.b16 %v1152
        %v1192 = vunpack.c.l.b16 %v1153
        %v1193 = vunpack.c.l.b16 %v1154
        %v1194 = vunpack.c.l.b16 %v1155
        %v1195 = vunpack.c.l.b16 %v1156
        %v1196 = vunpack.c.l.b16 %v1157
        %v1197 = vunpack.c.l.b16 %v1158
        %v1198 = vunpack.c.l.b16 %v1159
        %v1199 = vpack.c.b16 %v1184, %v1183
        %v1200 = vpack.c.b16 %v1186, %v1185
        %v1201 = vpack.c.b16 %v1188, %v1187
        %v1202 = vpack.c.b16 %v1190, %v1189
        %v1203 = vpack.c.b16 %v1192, %v1191
        %v1204 = vpack.c.b16 %v1194, %v1193
        %v1205 = vpack.c.b16 %v1196, %v1195
        %v1206 = vpack.c.b16 %v1198, %v1197
        %1215 = vmatprep.subr.bf16.mxu0 0
        %1216 = vmatpush1.bf16.msra.mxu0 %v1199
        %1217 = vmatprep.subr.bf16.mxu0 0
        %1218 = vmatpush1.bf16.msra.mxu0 %v1200
        %1219 = vmatprep.subr.bf16.mxu0 0
        %1220 = vmatpush1.bf16.msra.mxu0 %v1201
        %1221 = vmatprep.subr.bf16.mxu0 0
        %1222 = vmatpush1.bf16.msra.mxu0 %v1202
        %1223 = vmatprep.subr.bf16.mxu0 0
        %1224 = vmatpush1.bf16.msra.mxu0 %v1203
        %1225 = vmatprep.subr.bf16.mxu0 0
        %1226 = vmatpush1.bf16.msra.mxu0 %v1204
        %1227 = vmatprep.subr.bf16.mxu0 0
        %1228 = vmatpush1.bf16.msra.mxu0 %v1205
        %1229 = vmatprep.subr.bf16.mxu0 0
        %1230 = vmatpush1.bf16.msra.mxu0 %v1206
        %1231 = vmatprep.subr.bf16.mxu0 0
        %1232 = vmatpush1.bf16.msra.mxu0 0
        %1233 = vmatprep.subr.bf16.mxu0 0
        %1234 = vmatpush1.bf16.msra.mxu0 0
        %1235 = vmatprep.subr.bf16.mxu0 0
        %1236 = vmatpush1.bf16.msra.mxu0 0
        %1237 = vmatprep.subr.bf16.mxu0 0
        %1238 = vmatpush1.bf16.msra.mxu0 0
        %1239 = vmatprep.subr.bf16.mxu0 0
        %1240 = vmatpush1.bf16.msra.mxu0 0
        %1241 = vmatprep.subr.bf16.mxu0 0
        %1242 = vmatpush1.bf16.msra.mxu0 0
        %1243 = vmatprep.subr.bf16.mxu0 0
        %1244 = vmatpush1.bf16.msra.mxu0 0
        %1245 = vmatprep.subr.bf16.mxu0 0
        %1246 = vmatpush1.bf16.msra.mxu0 0
        %1247 = vmatprep.mubr.bf16.mxu0 0
        %1248 = vmatmul.mubr.bf16.gmra.mrb[0].mxu0 %v1128
        %v1249 = vpop.f32.mrb[0].mxu0
        %v1250 = vadd.f32 %v1165, %v1249
        %v1251 = vpop.f32.mrb[0].mxu0
        %v1252 = vpop.f32.mrb[0].mxu0
        %v1253 = vadd.f32 %v1165, %v1252
        %v1254 = vpop.f32.mrb[0].mxu0
        %1255 = vmatprep.mubr.bf16.mxu0 0
        %1256 = vmatmul.mubr.bf16.gmra.mrb[0].mxu0 %v1129
        %v1257 = vpop.f32.mrb[0].mxu0
        %v1258 = vadd.f32 %v1165, %v1257
        %v1259 = vpop.f32.mrb[0].mxu0
        %v1260 = vpop.f32.mrb[0].mxu0
        %v1261 = vadd.f32 %v1165, %v1260
        %v1262 = vpop.f32.mrb[0].mxu0
        %1263 = vmatprep.mubr.bf16.mxu0 0
        %1264 = vmatmul.mubr.bf16.gmra.mrb[0].mxu0 %v1130
        %v1265 = vpop.f32.mrb[0].mxu0
        %v1266 = vadd.f32 %v1165, %v1265
        %v1267 = vpop.f32.mrb[0].mxu0
        %v1268 = vpop.f32.mrb[0].mxu0
        %v1269 = vadd.f32 %v1165, %v1268
        %v1270 = vpop.f32.mrb[0].mxu0
        %1271 = vmatprep.mubr.bf16.mxu0 0
        %1272 = vmatmul.mubr.bf16.gmra.mrb[0].mxu0 %v1131
        %v1273 = vpop.f32.mrb[0].mxu0
        %v1274 = vadd.f32 %v1165, %v1273
        %v1275 = vpop.f32.mrb[0].mxu0
        %v1276 = vpop.f32.mrb[0].mxu0
        %v1277 = vadd.f32 %v1165, %v1276
        %v1278 = vpop.f32.mrb[0].mxu0
        %1279 = vmatprep.mubr.bf16.mxu0 0
        %1280 = vmatmul.mubr.bf16.gmra.mrb[0].mxu0 %v1132
        %v1281 = vpop.f32.mrb[0].mxu0
        %v1282 = vadd.f32 %v1165, %v1281
        %v1283 = vpop.f32.mrb[0].mxu0
        %v1284 = vpop.f32.mrb[0].mxu0
        %v1285 = vadd.f32 %v1165, %v1284
        %v1286 = vpop.f32.mrb[0].mxu0
        %1287 = vmatprep.mubr.bf16.mxu0 0
        %1288 = vmatmul.mubr.bf16.gmra.mrb[0].mxu0 %v1133
        %v1289 = vpop.f32.mrb[0].mxu0
        %v1290 = vadd.f32 %v1165, %v1289
        %v1291 = vpop.f32.mrb[0].mxu0
        %v1292 = vpop.f32.mrb[0].mxu0
        %v1293 = vadd.f32 %v1165, %v1292
        %v1294 = vpop.f32.mrb[0].mxu0
        %1295 = vmatprep.mubr.bf16.mxu0 0
        %1296 = vmatmul.mubr.bf16.gmra.mrb[0].mxu0 %v1134
        %v1297 = vpop.f32.mrb[0].mxu0
        %v1298 = vadd.f32 %v1165, %v1297
        %v1299 = vpop.f32.mrb[0].mxu0
        %v1300 = vpop.f32.mrb[0].mxu0
        %v1301 = vadd.f32 %v1165, %v1300
        %v1302 = vpop.f32.mrb[0].mxu0
        %1303 = vmatprep.mubr.bf16.mxu0 0
        %1304 = vmatmul.mubr.bf16.gmra.mrb[0].mxu0 %v1135
        %v1305 = vpop.f32.mrb[0].mxu0
        %v1306 = vadd.f32 %v1165, %v1305
        %v1307 = vpop.f32.mrb[0].mxu0
        %v1308 = vpop.f32.mrb[0].mxu0
        %v1309 = vadd.f32 %v1165, %v1308
        %v1310 = vpop.f32.mrb[0].mxu0
        %1311 = vmatprep.mubr.bf16.mxu0 0
        %1312 = vmatmul.mubr.bf16.gmra.mrb[0].mxu0 %v1136
        %v1313 = vpop.f32.mrb[0].mxu0
        %v1314 = vadd.f32 %v1165, %v1313
        %v1315 = vpop.f32.mrb[0].mxu0
        %v1316 = vpop.f32.mrb[0].mxu0
        %v1317 = vadd.f32 %v1165, %v1316
        %v1318 = vpop.f32.mrb[0].mxu0
        %1319 = vmatprep.mubr.bf16.mxu0 0
        %1320 = vmatmul.mubr.bf16.gmra.mrb[0].mxu0 %v1137
        %v1321 = vpop.f32.mrb[0].mxu0
        %v1322 = vadd.f32 %v1165, %v1321
        %v1323 = vpop.f32.mrb[0].mxu0
        %v1324 = vpop.f32.mrb[0].mxu0
        %v1325 = vadd.f32 %v1165, %v1324
        %v1326 = vpop.f32.mrb[0].mxu0
        %1327 = vmatprep.mubr.bf16.mxu0 0
        %1328 = vmatmul.mubr.bf16.gmra.mrb[0].mxu0 %v1138
        %v1329 = vpop.f32.mrb[0].mxu0
        %v1330 = vadd.f32 %v1165, %v1329
        %v1331 = vpop.f32.mrb[0].mxu0
        %v1332 = vpop.f32.mrb[0].mxu0
        %v1333 = vadd.f32 %v1165, %v1332
        %v1334 = vpop.f32.mrb[0].mxu0
        %1335 = vmatprep.mubr.bf16.mxu0 0
        %1336 = vmatmul.mubr.bf16.gmra.mrb[0].mxu0 %v1139
        %v1337 = vpop.f32.mrb[0].mxu0
        %v1338 = vadd.f32 %v1165, %v1337
        %v1339 = vpop.f32.mrb[0].mxu0
        %v1340 = vpop.f32.mrb[0].mxu0
        %v1341 = vadd.f32 %v1165, %v1340
        %v1342 = vpop.f32.mrb[0].mxu0
        %1343 = vmatprep.mubr.bf16.mxu0 0
        %1344 = vmatmul.mubr.bf16.gmra.mrb[0].mxu0 %v1140
        %v1345 = vpop.f32.mrb[0].mxu0
        %v1346 = vadd.f32 %v1165, %v1345
        %v1347 = vpop.f32.mrb[0].mxu0
        %v1348 = vpop.f32.mrb[0].mxu0
        %v1349 = vadd.f32 %v1165, %v1348
        %v1350 = vpop.f32.mrb[0].mxu0
        %1351 = vmatprep.mubr.bf16.mxu0 0
        %1352 = vmatmul.mubr.bf16.gmra.mrb[0].mxu0 %v1141
        %v1353 = vpop.f32.mrb[0].mxu0
        %v1354 = vadd.f32 %v1165, %v1353
        %v1355 = vpop.f32.mrb[0].mxu0
        %v1356 = vpop.f32.mrb[0].mxu0
        %v1357 = vadd.f32 %v1165, %v1356
        %v1358 = vpop.f32.mrb[0].mxu0
        %1359 = vmatprep.mubr.bf16.mxu0 0
        %1360 = vmatmul.mubr.bf16.gmra.mrb[0].mxu0 %v1142
        %v1361 = vpop.f32.mrb[0].mxu0
        %v1362 = vadd.f32 %v1165, %v1361
        %v1363 = vpop.f32.mrb[0].mxu0
        %v1364 = vpop.f32.mrb[0].mxu0
        %v1365 = vadd.f32 %v1165, %v1364
        %v1366 = vpop.f32.mrb[0].mxu0
        %1367 = vmatprep.mubr.bf16.mxu0 0
        %1368 = vmatmul.mubr.bf16.gmra.mrb[0].mxu0 %v1143
        %v1369 = vpop.f32.mrb[0].mxu0
        %v1370 = vadd.f32 %v1165, %v1369
        %v1371 = vpop.f32.mrb[0].mxu0
        %v1372 = vpop.f32.mrb[0].mxu0
        %v1373 = vadd.f32 %v1165, %v1372
        %v1374 = vpop.f32.mrb[0].mxu0
        %1375 = vdwg.mxu0
        %v1376 = vmax.f32 %v1250, 0.0
        %v1377 = vmax.f32 %v1253, 0.0
        %v1378 = vmax.f32 %v1258, 0.0
        %v1379 = vmax.f32 %v1261, 0.0
        %v1380 = vmax.f32 %v1266, 0.0
        %v1381 = vmax.f32 %v1269, 0.0
        %v1382 = vmax.f32 %v1274, 0.0
        %v1383 = vmax.f32 %v1277, 0.0
        %v1384 = vmax.f32 %v1282, 0.0
        %v1385 = vmax.f32 %v1285, 0.0
        %v1386 = vmax.f32 %v1290, 0.0
        %v1387 = vmax.f32 %v1293, 0.0
        %v1388 = vmax.f32 %v1298, 0.0
        %v1389 = vmax.f32 %v1301, 0.0
        %v1390 = vmax.f32 %v1306, 0.0
        %v1391 = vmax.f32 %v1309, 0.0
        %v1392 = vmax.f32 %v1314, 0.0
        %v1393 = vmax.f32 %v1317, 0.0
        %v1394 = vmax.f32 %v1322, 0.0
        %v1395 = vmax.f32 %v1325, 0.0
        %v1396 = vmax.f32 %v1330, 0.0
        %v1397 = vmax.f32 %v1333, 0.0
        %v1398 = vmax.f32 %v1338, 0.0
        %v1399 = vmax.f32 %v1341, 0.0
        %v1400 = vmax.f32 %v1346, 0.0
        %v1401 = vmax.f32 %v1349, 0.0
        %v1402 = vmax.f32 %v1354, 0.0
        %v1403 = vmax.f32 %v1357, 0.0
        %v1404 = vmax.f32 %v1362, 0.0
        %v1405 = vmax.f32 %v1365, 0.0
        %v1406 = vmax.f32 %v1370, 0.0
        %v1407 = vmax.f32 %v1373, 0.0
        %v1408 = vpack.c.bf16 %v1377, %v1376
        %v1409 = vpack.c.bf16 %v1379, %v1378
        %v1410 = vpack.c.bf16 %v1381, %v1380
        %v1411 = vpack.c.bf16 %v1383, %v1382
        %v1412 = vpack.c.bf16 %v1385, %v1384
        %v1413 = vpack.c.bf16 %v1387, %v1386
        %v1414 = vpack.c.bf16 %v1389, %v1388
        %v1415 = vpack.c.bf16 %v1391, %v1390
        %v1416 = vpack.c.bf16 %v1393, %v1392
        %v1417 = vpack.c.bf16 %v1395, %v1394
        %v1418 = vpack.c.bf16 %v1397, %v1396
        %v1419 = vpack.c.bf16 %v1399, %v1398
        %v1420 = vpack.c.bf16 %v1401, %v1400
        %v1421 = vpack.c.bf16 %v1403, %v1402
        %v1422 = vpack.c.bf16 %v1405, %v1404
        %v1423 = vpack.c.bf16 %v1407, %v1406
        %v1424 = vld [vmem:[%s7] sm:$0xf]
        %v1425 = vld [vmem:[%s7 + $0x4] sm:$0xf]
        %v1426 = vld [vmem:[%s7 + $0x8] sm:$0xf]
        %v1427 = vld [vmem:[%s7 + $0xc] sm:$0xf]
        %v1428 = vld [vmem:[%s7 + $0x10] sm:$0xf]
        %v1429 = vld [vmem:[%s7 + $0x14] sm:$0xf]
        %v1430 = vld [vmem:[%s7 + $0x18] sm:$0xf]
        %v1431 = vld [vmem:[%s7 + $0x1c] sm:$0xf]
        %v1432 = vld [vmem:[%s7 + $0x20] sm:$0xf]
        %v1433 = vld [vmem:[%s7 + $0x24] sm:$0xf]
        %v1434 = vld [vmem:[%s7 + $0x28] sm:$0xf]
        %v1435 = vld [vmem:[%s7 + $0x2c] sm:$0xf]
        %v1436 = vld [vmem:[%s7 + $0x30] sm:$0xf]
        %v1437 = vld [vmem:[%s7 + $0x34] sm:$0xf]
        %v1438 = vld [vmem:[%s7 + $0x38] sm:$0xf]
        %v1439 = vld [vmem:[%s7 + $0x3c] sm:$0xf]
        %v1440 = vld [vmem:[%s8] sm:$0x1]
        %v1442 = vlaneseq
        %v1443 = vshrl.u32 %v1442, 7
        %v1444 = vsub.s32 0, %v1443
        %v1445 = vrot.slane %v1440, %v1444
        %v1463 = vunpack.c.l.b16 %v1424
        %v1464 = vunpack.c.l.b16 %v1425
        %v1465 = vunpack.c.l.b16 %v1426
        %v1466 = vunpack.c.l.b16 %v1427
        %v1467 = vunpack.c.l.b16 %v1428
        %v1468 = vunpack.c.l.b16 %v1429
        %v1469 = vunpack.c.l.b16 %v1430
        %v1470 = vunpack.c.l.b16 %v1431
        %v1471 = vunpack.c.l.b16 %v1432
        %v1472 = vunpack.c.l.b16 %v1433
        %v1473 = vunpack.c.l.b16 %v1434
        %v1474 = vunpack.c.l.b16 %v1435
        %v1475 = vunpack.c.l.b16 %v1436
        %v1476 = vunpack.c.l.b16 %v1437
        %v1477 = vunpack.c.l.b16 %v1438
        %v1478 = vunpack.c.l.b16 %v1439
        %v1479 = vpack.c.b16 %v1464, %v1463
        %v1480 = vpack.c.b16 %v1466, %v1465
        %v1481 = vpack.c.b16 %v1468, %v1467
        %v1482 = vpack.c.b16 %v1470, %v1469
        %v1483 = vpack.c.b16 %v1472, %v1471
        %v1484 = vpack.c.b16 %v1474, %v1473
        %v1485 = vpack.c.b16 %v1476, %v1475
        %v1486 = vpack.c.b16 %v1478, %v1477
        %1495 = vmatprep.subr.bf16.mxu0 0
        %1496 = vmatpush1.bf16.msra.mxu0 %v1479
        %1497 = vmatprep.subr.bf16.mxu0 0
        %1498 = vmatpush1.bf16.msra.mxu0 %v1480
        %1499 = vmatprep.subr.bf16.mxu0 0
        %1500 = vmatpush1.bf16.msra.mxu0 %v1481
        %1501 = vmatprep.subr.bf16.mxu0 0
        %1502 = vmatpush1.bf16.msra.mxu0 %v1482
        %1503 = vmatprep.subr.bf16.mxu0 0
        %1504 = vmatpush1.bf16.msra.mxu0 %v1483
        %1505 = vmatprep.subr.bf16.mxu0 0
        %1506 = vmatpush1.bf16.msra.mxu0 %v1484
        %1507 = vmatprep.subr.bf16.mxu0 0
        %1508 = vmatpush1.bf16.msra.mxu0 %v1485
        %1509 = vmatprep.subr.bf16.mxu0 0
        %1510 = vmatpush1.bf16.msra.mxu0 %v1486
        %1511 = vmatprep.subr.bf16.mxu0 0
        %1512 = vmatpush1.bf16.msra.mxu0 0
        %1513 = vmatprep.subr.bf16.mxu0 0
        %1514 = vmatpush1.bf16.msra.mxu0 0
        %1515 = vmatprep.subr.bf16.mxu0 0
        %1516 = vmatpush1.bf16.msra.mxu0 0
        %1517 = vmatprep.subr.bf16.mxu0 0
        %1518 = vmatpush1.bf16.msra.mxu0 0
        %1519 = vmatprep.subr.bf16.mxu0 0
        %1520 = vmatpush1.bf16.msra.mxu0 0
        %1521 = vmatprep.subr.bf16.mxu0 0
        %1522 = vmatpush1.bf16.msra.mxu0 0
        %1523 = vmatprep.subr.bf16.mxu0 0
        %1524 = vmatpush1.bf16.msra.mxu0 0
        %1525 = vmatprep.subr.bf16.mxu0 0
        %1526 = vmatpush1.bf16.msra.mxu0 0
        %1527 = vmatprep.mubr.bf16.mxu0 0
        %1528 = vmatmul.mubr.bf16.gmra.mrb[0].mxu0 %v1408
        %v1529 = vpop.f32.mrb[0].mxu0
        %v1530 = vadd.f32 %v1445, %v1529
        %v1531 = vpop.f32.mrb[0].mxu0
        %v1532 = vpop.f32.mrb[0].mxu0
        %v1533 = vadd.f32 %v1445, %v1532
        %v1534 = vpop.f32.mrb[0].mxu0
        %1535 = vmatprep.mubr.bf16.mxu0 0
        %1536 = vmatmul.mubr.bf16.gmra.mrb[0].mxu0 %v1409
        %v1537 = vpop.f32.mrb[0].mxu0
        %v1538 = vadd.f32 %v1445, %v1537
        %v1539 = vpop.f32.mrb[0].mxu0
        %v1540 = vpop.f32.mrb[0].mxu0
        %v1541 = vadd.f32 %v1445, %v1540
        %v1542 = vpop.f32.mrb[0].mxu0
        %1543 = vmatprep.mubr.bf16.mxu0 0
        %1544 = vmatmul.mubr.bf16.gmra.mrb[0].mxu0 %v1410
        %v1545 = vpop.f32.mrb[0].mxu0
        %v1546 = vadd.f32 %v1445, %v1545
        %v1547 = vpop.f32.mrb[0].mxu0
        %v1548 = vpop.f32.mrb[0].mxu0
        %v1549 = vadd.f32 %v1445, %v1548
        %v1550 = vpop.f32.mrb[0].mxu0
        %1551 = vmatprep.mubr.bf16.mxu0 0
        %1552 = vmatmul.mubr.bf16.gmra.mrb[0].mxu0 %v1411
        %v1553 = vpop.f32.mrb[0].mxu0
        %v1554 = vadd.f32 %v1445, %v1553
        %v1555 = vpop.f32.mrb[0].mxu0
        %v1556 = vpop.f32.mrb[0].mxu0
        %v1557 = vadd.f32 %v1445, %v1556
        %v1558 = vpop.f32.mrb[0].mxu0
        %1559 = vmatprep.mubr.bf16.mxu0 0
        %1560 = vmatmul.mubr.bf16.gmra.mrb[0].mxu0 %v1412
        %v1561 = vpop.f32.mrb[0].mxu0
        %v1562 = vadd.f32 %v1445, %v1561
        %v1563 = vpop.f32.mrb[0].mxu0
        %v1564 = vpop.f32.mrb[0].mxu0
        %v1565 = vadd.f32 %v1445, %v1564
        %v1566 = vpop.f32.mrb[0].mxu0
        %1567 = vmatprep.mubr.bf16.mxu0 0
        %1568 = vmatmul.mubr.bf16.gmra.mrb[0].mxu0 %v1413
        %v1569 = vpop.f32.mrb[0].mxu0
        %v1570 = vadd.f32 %v1445, %v1569
        %v1571 = vpop.f32.mrb[0].mxu0
        %v1572 = vpop.f32.mrb[0].mxu0
        %v1573 = vadd.f32 %v1445, %v1572
        %v1574 = vpop.f32.mrb[0].mxu0
        %1575 = vmatprep.mubr.bf16.mxu0 0
        %1576 = vmatmul.mubr.bf16.gmra.mrb[0].mxu0 %v1414
        %v1577 = vpop.f32.mrb[0].mxu0
        %v1578 = vadd.f32 %v1445, %v1577
        %v1579 = vpop.f32.mrb[0].mxu0
        %v1580 = vpop.f32.mrb[0].mxu0
        %v1581 = vadd.f32 %v1445, %v1580
        %v1582 = vpop.f32.mrb[0].mxu0
        %1583 = vmatprep.mubr.bf16.mxu0 0
        %1584 = vmatmul.mubr.bf16.gmra.mrb[0].mxu0 %v1415
        %v1585 = vpop.f32.mrb[0].mxu0
        %v1586 = vadd.f32 %v1445, %v1585
        %v1587 = vpop.f32.mrb[0].mxu0
        %v1588 = vpop.f32.mrb[0].mxu0
        %v1589 = vadd.f32 %v1445, %v1588
        %v1590 = vpop.f32.mrb[0].mxu0
        %1591 = vmatprep.mubr.bf16.mxu0 0
        %1592 = vmatmul.mubr.bf16.gmra.mrb[0].mxu0 %v1416
        %v1593 = vpop.f32.mrb[0].mxu0
        %v1594 = vadd.f32 %v1445, %v1593
        %v1595 = vpop.f32.mrb[0].mxu0
        %v1596 = vpop.f32.mrb[0].mxu0
        %v1597 = vadd.f32 %v1445, %v1596
        %v1598 = vpop.f32.mrb[0].mxu0
        %1599 = vmatprep.mubr.bf16.mxu0 0
        %1600 = vmatmul.mubr.bf16.gmra.mrb[0].mxu0 %v1417
        %v1601 = vpop.f32.mrb[0].mxu0
        %v1602 = vadd.f32 %v1445, %v1601
        %v1603 = vpop.f32.mrb[0].mxu0
        %v1604 = vpop.f32.mrb[0].mxu0
        %v1605 = vadd.f32 %v1445, %v1604
        %v1606 = vpop.f32.mrb[0].mxu0
        %1607 = vmatprep.mubr.bf16.mxu0 0
        %1608 = vmatmul.mubr.bf16.gmra.mrb[0].mxu0 %v1418
        %v1609 = vpop.f32.mrb[0].mxu0
        %v1610 = vadd.f32 %v1445, %v1609
        %v1611 = vpop.f32.mrb[0].mxu0
        %v1612 = vpop.f32.mrb[0].mxu0
        %v1613 = vadd.f32 %v1445, %v1612
        %v1614 = vpop.f32.mrb[0].mxu0
        %1615 = vmatprep.mubr.bf16.mxu0 0
        %1616 = vmatmul.mubr.bf16.gmra.mrb[0].mxu0 %v1419
        %v1617 = vpop.f32.mrb[0].mxu0
        %v1618 = vadd.f32 %v1445, %v1617
        %v1619 = vpop.f32.mrb[0].mxu0
        %v1620 = vpop.f32.mrb[0].mxu0
        %v1621 = vadd.f32 %v1445, %v1620
        %v1622 = vpop.f32.mrb[0].mxu0
        %1623 = vmatprep.mubr.bf16.mxu0 0
        %1624 = vmatmul.mubr.bf16.gmra.mrb[0].mxu0 %v1420
        %v1625 = vpop.f32.mrb[0].mxu0
        %v1626 = vadd.f32 %v1445, %v1625
        %v1627 = vpop.f32.mrb[0].mxu0
        %v1628 = vpop.f32.mrb[0].mxu0
        %v1629 = vadd.f32 %v1445, %v1628
        %v1630 = vpop.f32.mrb[0].mxu0
        %1631 = vmatprep.mubr.bf16.mxu0 0
        %1632 = vmatmul.mubr.bf16.gmra.mrb[0].mxu0 %v1421
        %v1633 = vpop.f32.mrb[0].mxu0
        %v1634 = vadd.f32 %v1445, %v1633
        %v1635 = vpop.f32.mrb[0].mxu0
        %v1636 = vpop.f32.mrb[0].mxu0
        %v1637 = vadd.f32 %v1445, %v1636
        %v1638 = vpop.f32.mrb[0].mxu0
        %1639 = vmatprep.mubr.bf16.mxu0 0
        %1640 = vmatmul.mubr.bf16.gmra.mrb[0].mxu0 %v1422
        %v1641 = vpop.f32.mrb[0].mxu0
        %v1642 = vadd.f32 %v1445, %v1641
        %v1643 = vpop.f32.mrb[0].mxu0
        %v1644 = vpop.f32.mrb[0].mxu0
        %v1645 = vadd.f32 %v1445, %v1644
        %v1646 = vpop.f32.mrb[0].mxu0
        %1647 = vmatprep.mubr.bf16.mxu0 0
        %1648 = vmatmul.mubr.bf16.gmra.mrb[0].mxu0 %v1423
        %v1649 = vpop.f32.mrb[0].mxu0
        %v1650 = vadd.f32 %v1445, %v1649
        %v1651 = vpop.f32.mrb[0].mxu0
        %v1652 = vpop.f32.mrb[0].mxu0
        %v1653 = vadd.f32 %v1445, %v1652
        %v1654 = vpop.f32.mrb[0].mxu0
        %1655 = vdwg.mxu0
        %v1656 = vmax.f32 %v1530, -10.0
        %v1657 = vmax.f32 %v1533, -10.0
        %v1658 = vmax.f32 %v1538, -10.0
        %v1659 = vmax.f32 %v1541, -10.0
        %v1660 = vmax.f32 %v1546, -10.0
        %v1661 = vmax.f32 %v1549, -10.0
        %v1662 = vmax.f32 %v1554, -10.0
        %v1663 = vmax.f32 %v1557, -10.0
        %v1664 = vmax.f32 %v1562, -10.0
        %v1665 = vmax.f32 %v1565, -10.0
        %v1666 = vmax.f32 %v1570, -10.0
        %v1667 = vmax.f32 %v1573, -10.0
        %v1668 = vmax.f32 %v1578, -10.0
        %v1669 = vmax.f32 %v1581, -10.0
        %v1670 = vmax.f32 %v1586, -10.0
        %v1671 = vmax.f32 %v1589, -10.0
        %v1672 = vmax.f32 %v1594, -10.0
        %v1673 = vmax.f32 %v1597, -10.0
        %v1674 = vmax.f32 %v1602, -10.0
        %v1675 = vmax.f32 %v1605, -10.0
        %v1676 = vmax.f32 %v1610, -10.0
        %v1677 = vmax.f32 %v1613, -10.0
        %v1678 = vmax.f32 %v1618, -10.0
        %v1679 = vmax.f32 %v1621, -10.0
        %v1680 = vmax.f32 %v1626, -10.0
        %v1681 = vmax.f32 %v1629, -10.0
        %v1682 = vmax.f32 %v1634, -10.0
        %v1683 = vmax.f32 %v1637, -10.0
        %v1684 = vmax.f32 %v1642, -10.0
        %v1685 = vmax.f32 %v1645, -10.0
        %v1686 = vmax.f32 %v1650, -10.0
        %v1687 = vmax.f32 %v1653, -10.0
        %v1688 = vmin.f32 %v1656, 10.0
        %v1689 = vmin.f32 %v1657, 10.0
        %v1690 = vmin.f32 %v1658, 10.0
        %v1691 = vmin.f32 %v1659, 10.0
        %v1692 = vmin.f32 %v1660, 10.0
        %v1693 = vmin.f32 %v1661, 10.0
        %v1694 = vmin.f32 %v1662, 10.0
        %v1695 = vmin.f32 %v1663, 10.0
        %v1696 = vmin.f32 %v1664, 10.0
        %v1697 = vmin.f32 %v1665, 10.0
        %v1698 = vmin.f32 %v1666, 10.0
        %v1699 = vmin.f32 %v1667, 10.0
        %v1700 = vmin.f32 %v1668, 10.0
        %v1701 = vmin.f32 %v1669, 10.0
        %v1702 = vmin.f32 %v1670, 10.0
        %v1703 = vmin.f32 %v1671, 10.0
        %v1704 = vmin.f32 %v1672, 10.0
        %v1705 = vmin.f32 %v1673, 10.0
        %v1706 = vmin.f32 %v1674, 10.0
        %v1707 = vmin.f32 %v1675, 10.0
        %v1708 = vmin.f32 %v1676, 10.0
        %v1709 = vmin.f32 %v1677, 10.0
        %v1710 = vmin.f32 %v1678, 10.0
        %v1711 = vmin.f32 %v1679, 10.0
        %v1712 = vmin.f32 %v1680, 10.0
        %v1713 = vmin.f32 %v1681, 10.0
        %v1714 = vmin.f32 %v1682, 10.0
        %v1715 = vmin.f32 %v1683, 10.0
        %v1716 = vmin.f32 %v1684, 10.0
        %v1717 = vmin.f32 %v1685, 10.0
        %v1718 = vmin.f32 %v1686, 10.0
        %v1719 = vmin.f32 %v1687, 10.0
        %vm1720 = vcmask 64512
        %1721 = vst.msk [vmem:[%s371] sm:$0xff] %vm1720, %v1688
        %1722 = vst.msk [vmem:[%s371 + $0x8] sm:$0xff] %vm1720, %v1689
        %1723 = vst.msk [vmem:[%s371 + $0x10] sm:$0xff] %vm1720, %v1690
        %1724 = vst.msk [vmem:[%s371 + $0x18] sm:$0xff] %vm1720, %v1691
        %1725 = vst.msk [vmem:[%s371 + $0x20] sm:$0xff] %vm1720, %v1692
        %1726 = vst.msk [vmem:[%s371 + $0x28] sm:$0xff] %vm1720, %v1693
        %1727 = vst.msk [vmem:[%s371 + $0x30] sm:$0xff] %vm1720, %v1694
        %1728 = vst.msk [vmem:[%s371 + $0x38] sm:$0xff] %vm1720, %v1695
        %1729 = vst.msk [vmem:[%s371 + $0x40] sm:$0xff] %vm1720, %v1696
        %1730 = vst.msk [vmem:[%s371 + $0x48] sm:$0xff] %vm1720, %v1697
        %1731 = vst.msk [vmem:[%s371 + $0x50] sm:$0xff] %vm1720, %v1698
        %1732 = vst.msk [vmem:[%s371 + $0x58] sm:$0xff] %vm1720, %v1699
        %1733 = vst.msk [vmem:[%s371 + $0x60] sm:$0xff] %vm1720, %v1700
        %1734 = vst.msk [vmem:[%s371 + $0x68] sm:$0xff] %vm1720, %v1701
        %1735 = vst.msk [vmem:[%s371 + $0x70] sm:$0xff] %vm1720, %v1702
        %1736 = vst.msk [vmem:[%s371 + $0x78] sm:$0xff] %vm1720, %v1703
        %1737 = vst.msk [vmem:[%s371 + $0x80] sm:$0xff] %vm1720, %v1704
        %1738 = vst.msk [vmem:[%s371 + $0x88] sm:$0xff] %vm1720, %v1705
        %1739 = vst.msk [vmem:[%s371 + $0x90] sm:$0xff] %vm1720, %v1706
        %1740 = vst.msk [vmem:[%s371 + $0x98] sm:$0xff] %vm1720, %v1707
        %1741 = vst.msk [vmem:[%s371 + $0xa0] sm:$0xff] %vm1720, %v1708
        %1742 = vst.msk [vmem:[%s371 + $0xa8] sm:$0xff] %vm1720, %v1709
        %1743 = vst.msk [vmem:[%s371 + $0xb0] sm:$0xff] %vm1720, %v1710
        %1744 = vst.msk [vmem:[%s371 + $0xb8] sm:$0xff] %vm1720, %v1711
        %1745 = vst.msk [vmem:[%s371 + $0xc0] sm:$0xff] %vm1720, %v1712
        %1746 = vst.msk [vmem:[%s371 + $0xc8] sm:$0xff] %vm1720, %v1713
        %1747 = vst.msk [vmem:[%s371 + $0xd0] sm:$0xff] %vm1720, %v1714
        %1748 = vst.msk [vmem:[%s371 + $0xd8] sm:$0xff] %vm1720, %v1715
        %1749 = vst.msk [vmem:[%s371 + $0xe0] sm:$0xff] %vm1720, %v1716
        %1750 = vst.msk [vmem:[%s371 + $0xe8] sm:$0xff] %vm1720, %v1717
        %1751 = vst.msk [vmem:[%s371 + $0xf0] sm:$0xff] %vm1720, %v1718
        %1752 = vst.msk [vmem:[%s371 + $0xf8] sm:$0xff] %vm1720, %v1719
        %s1753 = smul.u32 32, %s21
        %p1754 = scmp.lt.s32.totalorder %s1753, 127
        %s1755 = scalar_select %p1754, %s1753, 127
        %s1756 = smul.addr %s1755, 8
        %s1757 = scalar_lea.vmem %s9, %s1756
        // Predicated region
        $region61: #{tpu_custom_call.1} parent=55 // pred_check
          %p1758 = pneg %p238
        $region62: #{tpu_custom_call.1} parent=55 // pred_check_branch
          %1760 = sbr.rel (%p1758) target = $region64
        $region63: #{tpu_custom_call.1} parent=55 // pred_region
          %s1761 = smul.u32 32, %s21
        $region64: #{tpu_custom_call.1} parent=55 // pred_fallthru
          _
      $region56: #{tpu_custom_call.1} parent=5 // pred_fallthru
        _
      %p1762 = scmp.le.s32.totalorder 2, %s16
      // Predicated region
      $region65: #{tpu_custom_call.1} parent=5 // pred_check
        %p1763 = pneg %p1762
      $region66: #{tpu_custom_call.1} parent=5 // pred_check_branch
        %1765 = sbr.rel (%p1763) target = $region68
      $region67: #{tpu_custom_call.1} parent=5 // pred_region
        %s1766 = ssub.s32 %s16, 2
        // Predicated region
        $region69: #{tpu_custom_call.1} parent=67 // pred_check
          %p1767 = pneg %p244
        $region70: #{tpu_custom_call.1} parent=67 // pred_check_branch
          %1769 = sbr.rel (%p1767) target = $region72
        $region71: #{tpu_custom_call.1} parent=67 // pred_region
          %s1770 = smul.u32 32, %s22
          %p1771 = scmp.lt.s32.totalorder %s1770, 127
          %s1772 = scalar_select %p1771, %s1770, 127
          %s1773 = smul.addr %s1772, 8
          %s1774 = scalar_lea.vmem %s9, %s1773
        $region72: #{tpu_custom_call.1} parent=67 // pred_fallthru
          _
      $region68: #{tpu_custom_call.1} parent=5 // pred_fallthru
        _
    $region6: #{tpu_custom_call.1} parent=1 // loop_footer
      %s20 = sadd.s32 1, %s16
    $region7: #{tpu_custom_call.1} parent=1 // loop_footer_branch
      %15 = sbr.rel target = $region3
    $region8: #{tpu_custom_call.1} parent=1 // loop_exit
      _
    %1775 = vsyncpa [#allocation3], 1
    %s1776 = scalar_lea.sflag [#allocation3], 1
    %1777 = vsyncpa %s1776, 1

</llo_original>
